<compile_context>
chip_gen: v6e
topology: v6e:2x2x1
jax: 0.10.0
libtpu: 0.0.40
codegen_flags: <defaults>
</compile_context>

<pallas_src>
import functools

import jax
import jax.numpy as jnp
from jax.experimental import pallas as pl
from jax.experimental.pallas import tpu as pltpu


def _leaky_relu(x, slope=0.2):
    return jnp.where(x >= 0, x, slope * x)


def _round_up(n, m):
    return ((n + m - 1) // m) * m


def stock_dnn_kernel(x_ref,
                     w1_ref, b1_ref,
                     w2_ref, b2_ref,
                     w3_ref, b3_ref,
                     w4_ref, b4_ref,
                     o_ref):
    bf16 = jnp.bfloat16
    # Layer 1: Linear(in_pad -> h0) + LeakyReLU(0.2)   (bf16 MXU, f32 accum)
    h = jnp.dot(x_ref[...], w1_ref[...], preferred_element_type=jnp.float32)
    h = _leaky_relu(h + b1_ref[...])
    # Layer 2: Linear(h0 -> h1) + LeakyReLU(0.2)
    h = jnp.dot(h.astype(bf16), w2_ref[...], preferred_element_type=jnp.float32)
    h = _leaky_relu(h + b2_ref[...])
    # Layer 3: Linear(h1 -> h2) + LeakyReLU(0.2)
    h = jnp.dot(h.astype(bf16), w3_ref[...], preferred_element_type=jnp.float32)
    h = _leaky_relu(h + b3_ref[...])
    # Layer 4: Linear(h2 -> out_pad), no activation (logits, lane-dense store)
    out = jnp.dot(h.astype(bf16), w4_ref[...], preferred_element_type=jnp.float32)
    out = out + b4_ref[...]
    o_ref[...] = out.astype(o_ref.dtype)


@functools.partial(jax.jit, static_argnames=("block_b",))
def stock_dnn_forward(x, params, *, block_b=None):
    """Fused MLP forward.  x: (B, input_dim) float32.  Returns (B, output_dim) f32."""
    (w1, b1), (w2, b2), (w3, b3), (w4, b4) = params
    B, in_dim = x.shape
    h0, h1, h2 = w1.shape[1], w2.shape[1], w3.shape[1]
    out_dim = w4.shape[1]

    # Lane-align the narrow feature dims (K of layer 1, N of layer 4).
    in_pad = _round_up(max(in_dim, 128), 128)
    out_pad = _round_up(max(out_dim, 128), 128)

    bf16 = jnp.bfloat16
    x_p = jnp.pad(x, ((0, 0), (0, in_pad - in_dim))).astype(bf16)
    w1_p = jnp.pad(w1, ((0, in_pad - in_dim), (0, 0))).astype(bf16)
    w2_p = w2.astype(bf16)
    w3_p = w3.astype(bf16)
    w4_p = jnp.pad(w4, ((0, 0), (0, out_pad - out_dim))).astype(bf16)
    b1_p = b1.astype(jnp.float32)
    b2_p = b2.astype(jnp.float32)
    b3_p = b3.astype(jnp.float32)
    b4_p = jnp.pad(b4, ((0, 0), (0, out_pad - out_dim))).astype(jnp.float32)

    # Explicit batch tile: single tile for small B, 256 rows (pipelined,
    # megacore-shardable) once B is large.
    if block_b is None:
        block_b = B if B <= 256 else 256
    grid = (pl.cdiv(B, block_b),)

    def batch_spec(feat):
        return pl.BlockSpec((block_b, feat), lambda i: (i, 0))

    def full_spec(r, c):
        # Weights / biases fully resident in VMEM (constant block every step).
        return pl.BlockSpec((r, c), lambda i: (0, 0))

    in_specs = [
        batch_spec(in_pad),
        full_spec(*w1_p.shape), full_spec(*b1_p.shape),
        full_spec(*w2_p.shape), full_spec(*b2_p.shape),
        full_spec(*w3_p.shape), full_spec(*b3_p.shape),
        full_spec(*w4_p.shape), full_spec(*b4_p.shape),
    ]
    out_spec = pl.BlockSpec((block_b, out_pad), lambda i: (i, 0))

    flops = 2 * B * (in_pad * h0 + h0 * h1 + h1 * h2 + h2 * out_pad)
    weight_bytes = 2 * (in_pad * h0 + h0 * h1 + h1 * h2 + h2 * out_pad)      # bf16
    bias_bytes = 4 * (h0 + h1 + h2 + out_pad)                                # f32
    io_bytes = 2 * B * in_pad + 4 * B * out_pad
    cost = pl.CostEstimate(
        flops=flops,
        transcendentals=0,
        bytes_accessed=weight_bytes + bias_bytes + io_bytes,
    )

    out_padded = pl.pallas_call(
        stock_dnn_kernel,
        out_shape=jax.ShapeDtypeStruct((B, out_pad), jnp.float32),
        grid=grid,
        in_specs=in_specs,
        out_specs=out_spec,
        compiler_params=pltpu.CompilerParams(
            dimension_semantics=("parallel",),
            vmem_limit_bytes=48 * 1024 * 1024,
        ),
        cost_estimate=cost,
    )(x_p, w1_p, b1_p, w2_p, b2_p, w3_p, b3_p, w4_p, b4_p)

    return out_padded[:, :out_dim]


def init_stock_dnn_params(key, input_dim, output_dim,
                          hidden_size=(1024, 512, 256)):
    """Deterministic init mimicking torch.nn.Linear defaults
    (uniform(-1/sqrt(fan_in), 1/sqrt(fan_in)) for weight and bias).
    Weights stored as (in, out) == transpose of PyTorch's (out, in)."""
    dims = [input_dim, *hidden_size, output_dim]
    params = []
    for fan_in, fan_out in zip(dims[:-1], dims[1:]):
        key, kw, kb = jax.random.split(key, 3)
        bound = 1.0 / jnp.sqrt(float(fan_in))
        w = jax.random.uniform(kw, (fan_in, fan_out), jnp.float32,
                               minval=-bound, maxval=bound)
        b = jax.random.uniform(kb, (1, fan_out), jnp.float32,
                               minval=-bound, maxval=bound)
        params.append((w, b))
    return params


def stock_dnn_reference(x, params, *, quantize_bf16=False):
    """Pure-JAX reference of the PyTorch forward.  With quantize_bf16=True it
    mirrors the kernel's bf16-operand / f32-accumulate numerics."""
    def q(a):
        return a.astype(jnp.bfloat16).astype(jnp.float32) if quantize_bf16 else a
    (w1, b1), (w2, b2), (w3, b3), (w4, b4) = params
    h = _leaky_relu(q(x) @ q(w1) + b1)
    h = _leaky_relu(q(h) @ q(w2) + b2)
    h = _leaky_relu(q(h) @ q(w3) + b3)
    return q(h) @ q(w4) + b4


# TODO(synk): compute_loss (nn.CrossEntropyLoss) is not part of forward() and is
# not implemented here.

if __name__ == "__main__":
    key = jax.random.PRNGKey(0)
    key, kx = jax.random.split(key)

    batch = 8
    input_dim = 32
    output_dim = 8
    hidden_size = (1024, 512, 256)  # module defaults

    x = jax.random.normal(kx, (batch, input_dim), jnp.float32)
    params = init_stock_dnn_params(key, input_dim, output_dim, hidden_size)

    out = stock_dnn_forward(x, params)
    out = jax.block_until_ready(out)
    assert out.shape == (batch, output_dim)

    # Tight check against a reference with the same bf16-operand numerics.
    ref_q = stock_dnn_reference(x, params, quantize_bf16=True)
    assert jnp.allclose(out, ref_q, atol=1e-2, rtol=1e-2), "mismatch vs bf16 reference"
    # Looser sanity check against the full-f32 PyTorch-equivalent math.
    ref_f32 = stock_dnn_reference(x, params, quantize_bf16=False)
    assert jnp.allclose(out, ref_f32, atol=1e-1, rtol=1e-1), "mismatch vs f32 reference"

    print("KERNEL_OK")
</pallas_src>

<mosaic_0001>
module attributes {stable_mosaic.version = 11 : i64} {
  func.func @stock_dnn_kernel(%arg0: i32, %arg1: memref<8x128xbf16, #tpu.memory_space<vmem>>, %arg2: memref<128x1024xbf16, #tpu.memory_space<vmem>>, %arg3: memref<1x1024xf32, #tpu.memory_space<vmem>>, %arg4: memref<1024x512xbf16, #tpu.memory_space<vmem>>, %arg5: memref<1x512xf32, #tpu.memory_space<vmem>>, %arg6: memref<512x256xbf16, #tpu.memory_space<vmem>>, %arg7: memref<1x256xf32, #tpu.memory_space<vmem>>, %arg8: memref<256x128xbf16, #tpu.memory_space<vmem>>, %arg9: memref<1x128xf32, #tpu.memory_space<vmem>>, %arg10: memref<8x128xf32, #tpu.memory_space<vmem>>) attributes {dimension_semantics = [#tpu.dimension_semantics<parallel>], iteration_bounds = array<i64: 1>, scalar_prefetch = 0 : i64, scratch_operands = 0 : i64, tpu.core_type = #tpu.core_type<tc>, window_params = [{transform_indices = @transform_0, window_bounds = array<i64: 8, 128>}, {pipeline_mode = #tpu.pipeline_mode<synchronous>, transform_indices = @transform_1, window_bounds = array<i64: 128, 1024>}, {pipeline_mode = #tpu.pipeline_mode<synchronous>, transform_indices = @transform_2, window_bounds = array<i64: 1, 1024>}, {pipeline_mode = #tpu.pipeline_mode<synchronous>, transform_indices = @transform_3, window_bounds = array<i64: 1024, 512>}, {pipeline_mode = #tpu.pipeline_mode<synchronous>, transform_indices = @transform_4, window_bounds = array<i64: 1, 512>}, {pipeline_mode = #tpu.pipeline_mode<synchronous>, transform_indices = @transform_5, window_bounds = array<i64: 512, 256>}, {pipeline_mode = #tpu.pipeline_mode<synchronous>, transform_indices = @transform_6, window_bounds = array<i64: 1, 256>}, {pipeline_mode = #tpu.pipeline_mode<synchronous>, transform_indices = @transform_7, window_bounds = array<i64: 256, 128>}, {pipeline_mode = #tpu.pipeline_mode<synchronous>, transform_indices = @transform_8, window_bounds = array<i64: 1, 128>}, {transform_indices = @transform_9, window_bounds = array<i64: 8, 128>}]} {
    %c0 = arith.constant 0 : index
    %c0_0 = arith.constant 0 : index
    %0 = vector.load %arg1[%c0, %c0_0] : memref<8x128xbf16, #tpu.memory_space<vmem>>, vector<8x128xbf16>
    %c0_1 = arith.constant 0 : index
    %c0_2 = arith.constant 0 : index
    %1 = vector.load %arg2[%c0_1, %c0_2] : memref<128x1024xbf16, #tpu.memory_space<vmem>>, vector<128x1024xbf16>
    %cst = arith.constant dense<0.000000e+00> : vector<8x1024xf32>
    %2 = tpu.matmul %0, %1, %cst {dimension_numbers = #tpu.dot_dimension_numbers<[1], [0], [0], [1], [0, 0, 1, 1], [], []>} : vector<8x128xbf16>, vector<128x1024xbf16>, vector<8x1024xf32> -> vector<8x1024xf32>
    %c0_3 = arith.constant 0 : index
    %c0_4 = arith.constant 0 : index
    %3 = vector.load %arg3[%c0_3, %c0_4] : memref<1x1024xf32, #tpu.memory_space<vmem>>, vector<1x1024xf32>
    %4 = vector.broadcast %3 : vector<1x1024xf32> to vector<8x1024xf32>
    %5 = arith.addf %2, %4 : vector<8x1024xf32>
    %cst_5 = arith.constant 0.000000e+00 : f32
    %6 = vector.broadcast %cst_5 : f32 to vector<8x1024xf32>
    %7 = arith.cmpf oge, %5, %6 : vector<8x1024xf32>
    %cst_6 = arith.constant 2.000000e-01 : f32
    %8 = vector.broadcast %cst_6 : f32 to vector<8x1024xf32>
    %9 = arith.mulf %8, %5 : vector<8x1024xf32>
    %10 = arith.select %7, %5, %9 : vector<8x1024xi1>, vector<8x1024xf32>
    %11 = arith.truncf %10 : vector<8x1024xf32> to vector<8x1024xbf16>
    %c0_7 = arith.constant 0 : index
    %c0_8 = arith.constant 0 : index
    %12 = vector.load %arg4[%c0_7, %c0_8] : memref<1024x512xbf16, #tpu.memory_space<vmem>>, vector<1024x512xbf16>
    %cst_9 = arith.constant dense<0.000000e+00> : vector<8x512xf32>
    %13 = tpu.matmul %11, %12, %cst_9 {dimension_numbers = #tpu.dot_dimension_numbers<[1], [0], [0], [1], [0, 0, 1, 1], [], []>} : vector<8x1024xbf16>, vector<1024x512xbf16>, vector<8x512xf32> -> vector<8x512xf32>
    %c0_10 = arith.constant 0 : index
    %c0_11 = arith.constant 0 : index
    %14 = vector.load %arg5[%c0_10, %c0_11] : memref<1x512xf32, #tpu.memory_space<vmem>>, vector<1x512xf32>
    %15 = vector.broadcast %14 : vector<1x512xf32> to vector<8x512xf32>
    %16 = arith.addf %13, %15 : vector<8x512xf32>
    %cst_12 = arith.constant 0.000000e+00 : f32
    %17 = vector.broadcast %cst_12 : f32 to vector<8x512xf32>
    %18 = arith.cmpf oge, %16, %17 : vector<8x512xf32>
    %cst_13 = arith.constant 2.000000e-01 : f32
    %19 = vector.broadcast %cst_13 : f32 to vector<8x512xf32>
    %20 = arith.mulf %19, %16 : vector<8x512xf32>
    %21 = arith.select %18, %16, %20 : vector<8x512xi1>, vector<8x512xf32>
    %22 = arith.truncf %21 : vector<8x512xf32> to vector<8x512xbf16>
    %c0_14 = arith.constant 0 : index
    %c0_15 = arith.constant 0 : index
    %23 = vector.load %arg6[%c0_14, %c0_15] : memref<512x256xbf16, #tpu.memory_space<vmem>>, vector<512x256xbf16>
    %cst_16 = arith.constant dense<0.000000e+00> : vector<8x256xf32>
    %24 = tpu.matmul %22, %23, %cst_16 {dimension_numbers = #tpu.dot_dimension_numbers<[1], [0], [0], [1], [0, 0, 1, 1], [], []>} : vector<8x512xbf16>, vector<512x256xbf16>, vector<8x256xf32> -> vector<8x256xf32>
    %c0_17 = arith.constant 0 : index
    %c0_18 = arith.constant 0 : index
    %25 = vector.load %arg7[%c0_17, %c0_18] : memref<1x256xf32, #tpu.memory_space<vmem>>, vector<1x256xf32>
    %26 = vector.broadcast %25 : vector<1x256xf32> to vector<8x256xf32>
    %27 = arith.addf %24, %26 : vector<8x256xf32>
    %cst_19 = arith.constant 0.000000e+00 : f32
    %28 = vector.broadcast %cst_19 : f32 to vector<8x256xf32>
    %29 = arith.cmpf oge, %27, %28 : vector<8x256xf32>
    %cst_20 = arith.constant 2.000000e-01 : f32
    %30 = vector.broadcast %cst_20 : f32 to vector<8x256xf32>
    %31 = arith.mulf %30, %27 : vector<8x256xf32>
    %32 = arith.select %29, %27, %31 : vector<8x256xi1>, vector<8x256xf32>
    %33 = arith.truncf %32 : vector<8x256xf32> to vector<8x256xbf16>
    %c0_21 = arith.constant 0 : index
    %c0_22 = arith.constant 0 : index
    %34 = vector.load %arg8[%c0_21, %c0_22] : memref<256x128xbf16, #tpu.memory_space<vmem>>, vector<256x128xbf16>
    %cst_23 = arith.constant dense<0.000000e+00> : vector<8x128xf32>
    %35 = tpu.matmul %33, %34, %cst_23 {dimension_numbers = #tpu.dot_dimension_numbers<[1], [0], [0], [1], [0, 0, 1, 1], [], []>} : vector<8x256xbf16>, vector<256x128xbf16>, vector<8x128xf32> -> vector<8x128xf32>
    %c0_24 = arith.constant 0 : index
    %c0_25 = arith.constant 0 : index
    %36 = vector.load %arg9[%c0_24, %c0_25] : memref<1x128xf32, #tpu.memory_space<vmem>>, vector<1x128xf32>
    %37 = vector.broadcast %36 : vector<1x128xf32> to vector<8x128xf32>
    %38 = arith.addf %35, %37 : vector<8x128xf32>
    %c0_26 = arith.constant 0 : index
    %c0_27 = arith.constant 0 : index
    %39 = vector.load %arg10[%c0_26, %c0_27] : memref<8x128xf32, #tpu.memory_space<vmem>>, vector<8x128xf32>
    tpu.vector_store %arg10[%c0_26, %c0_27], %38 {strides = array<i32>} : memref<8x128xf32, #tpu.memory_space<vmem>>, vector<8x128xf32>,
    return
  }
  func.func @transform_0(%arg0: i32) -> (i32, i32) {
    %c0_i32 = arith.constant 0 : i32
    %c0_i32_0 = arith.constant 0 : i32
    return %arg0, %c0_i32 : i32, i32
  }
  func.func @transform_1(%arg0: i32) -> (i32, i32) {
    %c0_i32 = arith.constant 0 : i32
    %c0_i32_0 = arith.constant 0 : i32
    %c0_i32_1 = arith.constant 0 : i32
    return %c0_i32, %c0_i32_0 : i32, i32
  }
  func.func @transform_2(%arg0: i32) -> (i32, i32) {
    %c0_i32 = arith.constant 0 : i32
    %c0_i32_0 = arith.constant 0 : i32
    %c0_i32_1 = arith.constant 0 : i32
    return %c0_i32, %c0_i32_0 : i32, i32
  }
  func.func @transform_3(%arg0: i32) -> (i32, i32) {
    %c0_i32 = arith.constant 0 : i32
    %c0_i32_0 = arith.constant 0 : i32
    %c0_i32_1 = arith.constant 0 : i32
    return %c0_i32, %c0_i32_0 : i32, i32
  }
  func.func @transform_4(%arg0: i32) -> (i32, i32) {
    %c0_i32 = arith.constant 0 : i32
    %c0_i32_0 = arith.constant 0 : i32
    %c0_i32_1 = arith.constant 0 : i32
    return %c0_i32, %c0_i32_0 : i32, i32
  }
  func.func @transform_5(%arg0: i32) -> (i32, i32) {
    %c0_i32 = arith.constant 0 : i32
    %c0_i32_0 = arith.constant 0 : i32
    %c0_i32_1 = arith.constant 0 : i32
    return %c0_i32, %c0_i32_0 : i32, i32
  }
  func.func @transform_6(%arg0: i32) -> (i32, i32) {
    %c0_i32 = arith.constant 0 : i32
    %c0_i32_0 = arith.constant 0 : i32
    %c0_i32_1 = arith.constant 0 : i32
    return %c0_i32, %c0_i32_0 : i32, i32
  }
  func.func @transform_7(%arg0: i32) -> (i32, i32) {
    %c0_i32 = arith.constant 0 : i32
    %c0_i32_0 = arith.constant 0 : i32
    %c0_i32_1 = arith.constant 0 : i32
    return %c0_i32, %c0_i32_0 : i32, i32
  }
  func.func @transform_8(%arg0: i32) -> (i32, i32) {
    %c0_i32 = arith.constant 0 : i32
    %c0_i32_0 = arith.constant 0 : i32
    %c0_i32_1 = arith.constant 0 : i32
    return %c0_i32, %c0_i32_0 : i32, i32
  }
  func.func @transform_9(%arg0: i32) -> (i32, i32) {
    %c0_i32 = arith.constant 0 : i32
    %c0_i32_0 = arith.constant 0 : i32
    return %arg0, %c0_i32 : i32, i32
  }
}

</mosaic_0001>

<llo_original>
// kernel: stock_dnn_forward.1
$region0: #{stock_dnn_forward.1}
  #allocation0 [shape = 'u32[]', space=smem, size = 0x4, offset = 0x4, fixed_abs, tag = 'smem constant byte address 0x4 - core index']
  #allocation1 [shape = 'u32[144,128]{1,0:T(1,128)}', space=vmem, size = 0x12000, scoped, tag = 'internal scratch']
  %s0 = inlined_call_operand.vmem [shape: bf16[8,128], index: 0, kind: input, shape index: {}]
  %s1 = inlined_call_operand.vmem [shape: bf16[128,1024], index: 1, kind: input, shape index: {}]
  %s2 = inlined_call_operand.vmem [shape: f32[1,1024], index: 2, kind: input, shape index: {}]
  %s3 = inlined_call_operand.vmem [shape: bf16[1024,512], index: 3, kind: input, shape index: {}]
  %s4 = inlined_call_operand.vmem [shape: f32[1,512], index: 4, kind: input, shape index: {}]
  %s5 = inlined_call_operand.vmem [shape: bf16[512,256], index: 5, kind: input, shape index: {}]
  %s6 = inlined_call_operand.vmem [shape: f32[1,256], index: 6, kind: input, shape index: {}]
  %s7 = inlined_call_operand.vmem [shape: bf16[256,128], index: 7, kind: input, shape index: {}]
  %s8 = inlined_call_operand.vmem [shape: f32[1,128], index: 8, kind: input, shape index: {}]
  %s9 = inlined_call_operand.hbm [shape: f32[8,128], index: 9, kind: output, shape index: {}]
  %s10 = sld [smem:[#allocation0]]
  $region46: #{stock_dnn_forward.1} parent=0
    _
  %s12 = ssub.s32 1, %s10
  %s13 = scalar_select 0, %s12, %s10
  $region1: #{stock_dnn_forward.1} parent=0
    #allocation2 [shape = 'u8[4096]{0}', space=vmem, size = 0x1000, scoped, tag = 'output window, operand 0, single buffered']
    #allocation3 [shape = 's32[1]{0}', space=sflag, size = 0x4, scoped, tag = 'scoped memory for stock_dnn_forward.1']
    %14 = vsyncpa [#allocation3], 0
    // Predicated region
    $region2: #{stock_dnn_forward.1} parent=1 // pred_check
      _
    $region3: #{stock_dnn_forward.1} parent=1 // pred_check_branch
      %16 = sbr.rel (0) target = $region5
    $region4: #{stock_dnn_forward.1} parent=1 // pred_region
      _
    $region5: #{stock_dnn_forward.1} parent=1 // pred_fallthru
      _
    // Predicated region
    $region6: #{stock_dnn_forward.1} parent=1 // pred_check
      _
    $region7: #{stock_dnn_forward.1} parent=1 // pred_check_branch
      %18 = sbr.rel (0) target = $region9
    $region8: #{stock_dnn_forward.1} parent=1 // pred_region
      _
    $region9: #{stock_dnn_forward.1} parent=1 // pred_fallthru
      _
    // Predicated region
    $region10: #{stock_dnn_forward.1} parent=1 // pred_check
      _
    $region11: #{stock_dnn_forward.1} parent=1 // pred_check_branch
      %20 = sbr.rel (0) target = $region13
    $region12: #{stock_dnn_forward.1} parent=1 // pred_region
      _
    $region13: #{stock_dnn_forward.1} parent=1 // pred_fallthru
      _
    // Predicated region
    $region14: #{stock_dnn_forward.1} parent=1 // pred_check
      _
    $region15: #{stock_dnn_forward.1} parent=1 // pred_check_branch
      %22 = sbr.rel (0) target = $region17
    $region16: #{stock_dnn_forward.1} parent=1 // pred_region
      _
    $region17: #{stock_dnn_forward.1} parent=1 // pred_fallthru
      _
    // Predicated region
    $region18: #{stock_dnn_forward.1} parent=1 // pred_check
      _
    $region19: #{stock_dnn_forward.1} parent=1 // pred_check_branch
      %24 = sbr.rel (0) target = $region21
    $region20: #{stock_dnn_forward.1} parent=1 // pred_region
      _
    $region21: #{stock_dnn_forward.1} parent=1 // pred_fallthru
      _
    // Predicated region
    $region22: #{stock_dnn_forward.1} parent=1 // pred_check
      _
    $region23: #{stock_dnn_forward.1} parent=1 // pred_check_branch
      %26 = sbr.rel (0) target = $region25
    $region24: #{stock_dnn_forward.1} parent=1 // pred_region
      _
    $region25: #{stock_dnn_forward.1} parent=1 // pred_fallthru
      _
    // Predicated region
    $region26: #{stock_dnn_forward.1} parent=1 // pred_check
      _
    $region27: #{stock_dnn_forward.1} parent=1 // pred_check_branch
      %28 = sbr.rel (0) target = $region29
    $region28: #{stock_dnn_forward.1} parent=1 // pred_region
      _
    $region29: #{stock_dnn_forward.1} parent=1 // pred_fallthru
      _
    // Predicated region
    $region30: #{stock_dnn_forward.1} parent=1 // pred_check
      _
    $region31: #{stock_dnn_forward.1} parent=1 // pred_check_branch
      %30 = sbr.rel (0) target = $region33
    $region32: #{stock_dnn_forward.1} parent=1 // pred_region
      _
    $region33: #{stock_dnn_forward.1} parent=1 // pred_fallthru
      _
    // Predicated region
    $region34: #{stock_dnn_forward.1} parent=1 // pred_check
      _
    $region35: #{stock_dnn_forward.1} parent=1 // pred_check_branch
      %32 = sbr.rel (0) target = $region37
    $region36: #{stock_dnn_forward.1} parent=1 // pred_region
      _
    $region37: #{stock_dnn_forward.1} parent=1 // pred_fallthru
      _
    %v34 = vld [vmem:[%s0] sm:$0xf]
    %v35 = vld [vmem:[%s1] sm:$0xff]
    %v36 = vld [vmem:[%s1 + $0x8] sm:$0xff]
    %v37 = vld [vmem:[%s1 + $0x10] sm:$0xff]
    %v38 = vld [vmem:[%s1 + $0x18] sm:$0xff]
    %v39 = vld [vmem:[%s1 + $0x20] sm:$0xff]
    %v40 = vld [vmem:[%s1 + $0x28] sm:$0xff]
    %v41 = vld [vmem:[%s1 + $0x30] sm:$0xff]
    %v42 = vld [vmem:[%s1 + $0x38] sm:$0xff]
    %v43 = vld [vmem:[%s1 + $0x40] sm:$0xff]
    %v44 = vld [vmem:[%s1 + $0x48] sm:$0xff]
    %v45 = vld [vmem:[%s1 + $0x50] sm:$0xff]
    %v46 = vld [vmem:[%s1 + $0x58] sm:$0xff]
    %v47 = vld [vmem:[%s1 + $0x60] sm:$0xff]
    %v48 = vld [vmem:[%s1 + $0x68] sm:$0xff]
    %v49 = vld [vmem:[%s1 + $0x70] sm:$0xff]
    %v50 = vld [vmem:[%s1 + $0x78] sm:$0xff]
    %v51 = vld [vmem:[%s1 + $0x80] sm:$0xff]
    %v52 = vld [vmem:[%s1 + $0x88] sm:$0xff]
    %v53 = vld [vmem:[%s1 + $0x90] sm:$0xff]
    %v54 = vld [vmem:[%s1 + $0x98] sm:$0xff]
    %v55 = vld [vmem:[%s1 + $0xa0] sm:$0xff]
    %v56 = vld [vmem:[%s1 + $0xa8] sm:$0xff]
    %v57 = vld [vmem:[%s1 + $0xb0] sm:$0xff]
    %v58 = vld [vmem:[%s1 + $0xb8] sm:$0xff]
    %v59 = vld [vmem:[%s1 + $0xc0] sm:$0xff]
    %v60 = vld [vmem:[%s1 + $0xc8] sm:$0xff]
    %v61 = vld [vmem:[%s1 + $0xd0] sm:$0xff]
    %v62 = vld [vmem:[%s1 + $0xd8] sm:$0xff]
    %v63 = vld [vmem:[%s1 + $0xe0] sm:$0xff]
    %v64 = vld [vmem:[%s1 + $0xe8] sm:$0xff]
    %v65 = vld [vmem:[%s1 + $0xf0] sm:$0xff]
    %v66 = vld [vmem:[%s1 + $0xf8] sm:$0xff]
    %v67 = vld [vmem:[%s1 + $0x100] sm:$0xff]
    %v68 = vld [vmem:[%s1 + $0x108] sm:$0xff]
    %v69 = vld [vmem:[%s1 + $0x110] sm:$0xff]
    %v70 = vld [vmem:[%s1 + $0x118] sm:$0xff]
    %v71 = vld [vmem:[%s1 + $0x120] sm:$0xff]
    %v72 = vld [vmem:[%s1 + $0x128] sm:$0xff]
    %v73 = vld [vmem:[%s1 + $0x130] sm:$0xff]
    %v74 = vld [vmem:[%s1 + $0x138] sm:$0xff]
    %v75 = vld [vmem:[%s1 + $0x140] sm:$0xff]
    %v76 = vld [vmem:[%s1 + $0x148] sm:$0xff]
    %v77 = vld [vmem:[%s1 + $0x150] sm:$0xff]
    %v78 = vld [vmem:[%s1 + $0x158] sm:$0xff]
    %v79 = vld [vmem:[%s1 + $0x160] sm:$0xff]
    %v80 = vld [vmem:[%s1 + $0x168] sm:$0xff]
    %v81 = vld [vmem:[%s1 + $0x170] sm:$0xff]
    %v82 = vld [vmem:[%s1 + $0x178] sm:$0xff]
    %v83 = vld [vmem:[%s1 + $0x180] sm:$0xff]
    %v84 = vld [vmem:[%s1 + $0x188] sm:$0xff]
    %v85 = vld [vmem:[%s1 + $0x190] sm:$0xff]
    %v86 = vld [vmem:[%s1 + $0x198] sm:$0xff]
    %v87 = vld [vmem:[%s1 + $0x1a0] sm:$0xff]
    %v88 = vld [vmem:[%s1 + $0x1a8] sm:$0xff]
    %v89 = vld [vmem:[%s1 + $0x1b0] sm:$0xff]
    %v90 = vld [vmem:[%s1 + $0x1b8] sm:$0xff]
    %v91 = vld [vmem:[%s1 + $0x1c0] sm:$0xff]
    %v92 = vld [vmem:[%s1 + $0x1c8] sm:$0xff]
    %v93 = vld [vmem:[%s1 + $0x1d0] sm:$0xff]
    %v94 = vld [vmem:[%s1 + $0x1d8] sm:$0xff]
    %v95 = vld [vmem:[%s1 + $0x1e0] sm:$0xff]
    %v96 = vld [vmem:[%s1 + $0x1e8] sm:$0xff]
    %v97 = vld [vmem:[%s1 + $0x1f0] sm:$0xff]
    %v98 = vld [vmem:[%s1 + $0x1f8] sm:$0xff]
    %v99 = vld [vmem:[%s2] sm:$0xff]
    %v101 = vlaneseq
    %v102 = vshrl.u32 %v101, 7
    %v103 = vsub.s32 0, %v102
    %v104 = vrot.slane %v99, %v103
    %v105 = vlaneseq
    %v106 = vshrl.u32 %v105, 7
    %v107 = vsub.s32 1, %v106
    %v108 = vrot.slane %v99, %v107
    %v109 = vlaneseq
    %v110 = vshrl.u32 %v109, 7
    %v111 = vsub.s32 2, %v110
    %v112 = vrot.slane %v99, %v111
    %v113 = vlaneseq
    %v114 = vshrl.u32 %v113, 7
    %v115 = vsub.s32 3, %v114
    %v116 = vrot.slane %v99, %v115
    %v117 = vlaneseq
    %v118 = vshrl.u32 %v117, 7
    %v119 = vsub.s32 4, %v118
    %v120 = vrot.slane %v99, %v119
    %v121 = vlaneseq
    %v122 = vshrl.u32 %v121, 7
    %v123 = vsub.s32 5, %v122
    %v124 = vrot.slane %v99, %v123
    %v125 = vlaneseq
    %v126 = vshrl.u32 %v125, 7
    %v127 = vsub.s32 6, %v126
    %v128 = vrot.slane %v99, %v127
    %v129 = vlaneseq
    %v130 = vshrl.u32 %v129, 7
    %v131 = vsub.s32 7, %v130
    %v132 = vrot.slane %v99, %v131
    %v205 = vunpack.c.l.b16 %v35
    %v206 = vunpack.c.h.b16 %v35
    %v207 = vunpack.c.l.b16 %v36
    %v208 = vunpack.c.h.b16 %v36
    %v209 = vunpack.c.l.b16 %v37
    %v210 = vunpack.c.h.b16 %v37
    %v211 = vunpack.c.l.b16 %v38
    %v212 = vunpack.c.h.b16 %v38
    %v213 = vunpack.c.l.b16 %v39
    %v214 = vunpack.c.h.b16 %v39
    %v215 = vunpack.c.l.b16 %v40
    %v216 = vunpack.c.h.b16 %v40
    %v217 = vunpack.c.l.b16 %v41
    %v218 = vunpack.c.h.b16 %v41
    %v219 = vunpack.c.l.b16 %v42
    %v220 = vunpack.c.h.b16 %v42
    %v221 = vunpack.c.l.b16 %v43
    %v222 = vunpack.c.h.b16 %v43
    %v223 = vunpack.c.l.b16 %v44
    %v224 = vunpack.c.h.b16 %v44
    %v225 = vunpack.c.l.b16 %v45
    %v226 = vunpack.c.h.b16 %v45
    %v227 = vunpack.c.l.b16 %v46
    %v228 = vunpack.c.h.b16 %v46
    %v229 = vunpack.c.l.b16 %v47
    %v230 = vunpack.c.h.b16 %v47
    %v231 = vunpack.c.l.b16 %v48
    %v232 = vunpack.c.h.b16 %v48
    %v233 = vunpack.c.l.b16 %v49
    %v234 = vunpack.c.h.b16 %v49
    %v235 = vunpack.c.l.b16 %v50
    %v236 = vunpack.c.h.b16 %v50
    %v237 = vunpack.c.l.b16 %v51
    %v238 = vunpack.c.h.b16 %v51
    %v239 = vunpack.c.l.b16 %v52
    %v240 = vunpack.c.h.b16 %v52
    %v241 = vunpack.c.l.b16 %v53
    %v242 = vunpack.c.h.b16 %v53
    %v243 = vunpack.c.l.b16 %v54
    %v244 = vunpack.c.h.b16 %v54
    %v245 = vunpack.c.l.b16 %v55
    %v246 = vunpack.c.h.b16 %v55
    %v247 = vunpack.c.l.b16 %v56
    %v248 = vunpack.c.h.b16 %v56
    %v249 = vunpack.c.l.b16 %v57
    %v250 = vunpack.c.h.b16 %v57
    %v251 = vunpack.c.l.b16 %v58
    %v252 = vunpack.c.h.b16 %v58
    %v253 = vunpack.c.l.b16 %v59
    %v254 = vunpack.c.h.b16 %v59
    %v255 = vunpack.c.l.b16 %v60
    %v256 = vunpack.c.h.b16 %v60
    %v257 = vunpack.c.l.b16 %v61
    %v258 = vunpack.c.h.b16 %v61
    %v259 = vunpack.c.l.b16 %v62
    %v260 = vunpack.c.h.b16 %v62
    %v261 = vunpack.c.l.b16 %v63
    %v262 = vunpack.c.h.b16 %v63
    %v263 = vunpack.c.l.b16 %v64
    %v264 = vunpack.c.h.b16 %v64
    %v265 = vunpack.c.l.b16 %v65
    %v266 = vunpack.c.h.b16 %v65
    %v267 = vunpack.c.l.b16 %v66
    %v268 = vunpack.c.h.b16 %v66
    %v269 = vunpack.c.l.b16 %v67
    %v270 = vunpack.c.h.b16 %v67
    %v271 = vunpack.c.l.b16 %v68
    %v272 = vunpack.c.h.b16 %v68
    %v273 = vunpack.c.l.b16 %v69
    %v274 = vunpack.c.h.b16 %v69
    %v275 = vunpack.c.l.b16 %v70
    %v276 = vunpack.c.h.b16 %v70
    %v277 = vunpack.c.l.b16 %v71
    %v278 = vunpack.c.h.b16 %v71
    %v279 = vunpack.c.l.b16 %v72
    %v280 = vunpack.c.h.b16 %v72
    %v281 = vunpack.c.l.b16 %v73
    %v282 = vunpack.c.h.b16 %v73
    %v283 = vunpack.c.l.b16 %v74
    %v284 = vunpack.c.h.b16 %v74
    %v285 = vunpack.c.l.b16 %v75
    %v286 = vunpack.c.h.b16 %v75
    %v287 = vunpack.c.l.b16 %v76
    %v288 = vunpack.c.h.b16 %v76
    %v289 = vunpack.c.l.b16 %v77
    %v290 = vunpack.c.h.b16 %v77
    %v291 = vunpack.c.l.b16 %v78
    %v292 = vunpack.c.h.b16 %v78
    %v293 = vunpack.c.l.b16 %v79
    %v294 = vunpack.c.h.b16 %v79
    %v295 = vunpack.c.l.b16 %v80
    %v296 = vunpack.c.h.b16 %v80
    %v297 = vunpack.c.l.b16 %v81
    %v298 = vunpack.c.h.b16 %v81
    %v299 = vunpack.c.l.b16 %v82
    %v300 = vunpack.c.h.b16 %v82
    %v301 = vunpack.c.l.b16 %v83
    %v302 = vunpack.c.h.b16 %v83
    %v303 = vunpack.c.l.b16 %v84
    %v304 = vunpack.c.h.b16 %v84
    %v305 = vunpack.c.l.b16 %v85
    %v306 = vunpack.c.h.b16 %v85
    %v307 = vunpack.c.l.b16 %v86
    %v308 = vunpack.c.h.b16 %v86
    %v309 = vunpack.c.l.b16 %v87
    %v310 = vunpack.c.h.b16 %v87
    %v311 = vunpack.c.l.b16 %v88
    %v312 = vunpack.c.h.b16 %v88
    %v313 = vunpack.c.l.b16 %v89
    %v314 = vunpack.c.h.b16 %v89
    %v315 = vunpack.c.l.b16 %v90
    %v316 = vunpack.c.h.b16 %v90
    %v317 = vunpack.c.l.b16 %v91
    %v318 = vunpack.c.h.b16 %v91
    %v319 = vunpack.c.l.b16 %v92
    %v320 = vunpack.c.h.b16 %v92
    %v321 = vunpack.c.l.b16 %v93
    %v322 = vunpack.c.h.b16 %v93
    %v323 = vunpack.c.l.b16 %v94
    %v324 = vunpack.c.h.b16 %v94
    %v325 = vunpack.c.l.b16 %v95
    %v326 = vunpack.c.h.b16 %v95
    %v327 = vunpack.c.l.b16 %v96
    %v328 = vunpack.c.h.b16 %v96
    %v329 = vunpack.c.l.b16 %v97
    %v330 = vunpack.c.h.b16 %v97
    %v331 = vunpack.c.l.b16 %v98
    %v332 = vunpack.c.h.b16 %v98
    %v333 = vpack.c.b16 %v213, %v205
    %v334 = vpack.c.b16 %v214, %v206
    %v335 = vpack.c.b16 %v215, %v207
    %v336 = vpack.c.b16 %v216, %v208
    %v337 = vpack.c.b16 %v217, %v209
    %v338 = vpack.c.b16 %v218, %v210
    %v339 = vpack.c.b16 %v219, %v211
    %v340 = vpack.c.b16 %v220, %v212
    %v341 = vpack.c.b16 %v229, %v221
    %v342 = vpack.c.b16 %v230, %v222
    %v343 = vpack.c.b16 %v231, %v223
    %v344 = vpack.c.b16 %v232, %v224
    %v345 = vpack.c.b16 %v233, %v225
    %v346 = vpack.c.b16 %v234, %v226
    %v347 = vpack.c.b16 %v235, %v227
    %v348 = vpack.c.b16 %v236, %v228
    %v349 = vpack.c.b16 %v245, %v237
    %v350 = vpack.c.b16 %v246, %v238
    %v351 = vpack.c.b16 %v247, %v239
    %v352 = vpack.c.b16 %v248, %v240
    %v353 = vpack.c.b16 %v249, %v241
    %v354 = vpack.c.b16 %v250, %v242
    %v355 = vpack.c.b16 %v251, %v243
    %v356 = vpack.c.b16 %v252, %v244
    %v357 = vpack.c.b16 %v261, %v253
    %v358 = vpack.c.b16 %v262, %v254
    %v359 = vpack.c.b16 %v263, %v255
    %v360 = vpack.c.b16 %v264, %v256
    %v361 = vpack.c.b16 %v265, %v257
    %v362 = vpack.c.b16 %v266, %v258
    %v363 = vpack.c.b16 %v267, %v259
    %v364 = vpack.c.b16 %v268, %v260
    %v365 = vpack.c.b16 %v277, %v269
    %v366 = vpack.c.b16 %v278, %v270
    %v367 = vpack.c.b16 %v279, %v271
    %v368 = vpack.c.b16 %v280, %v272
    %v369 = vpack.c.b16 %v281, %v273
    %v370 = vpack.c.b16 %v282, %v274
    %v371 = vpack.c.b16 %v283, %v275
    %v372 = vpack.c.b16 %v284, %v276
    %v373 = vpack.c.b16 %v293, %v285
    %v374 = vpack.c.b16 %v294, %v286
    %v375 = vpack.c.b16 %v295, %v287
    %v376 = vpack.c.b16 %v296, %v288
    %v377 = vpack.c.b16 %v297, %v289
    %v378 = vpack.c.b16 %v298, %v290
    %v379 = vpack.c.b16 %v299, %v291
    %v380 = vpack.c.b16 %v300, %v292
    %v381 = vpack.c.b16 %v309, %v301
    %v382 = vpack.c.b16 %v310, %v302
    %v383 = vpack.c.b16 %v311, %v303
    %v384 = vpack.c.b16 %v312, %v304
    %v385 = vpack.c.b16 %v313, %v305
    %v386 = vpack.c.b16 %v314, %v306
    %v387 = vpack.c.b16 %v315, %v307
    %v388 = vpack.c.b16 %v316, %v308
    %v389 = vpack.c.b16 %v325, %v317
    %v390 = vpack.c.b16 %v326, %v318
    %v391 = vpack.c.b16 %v327, %v319
    %v392 = vpack.c.b16 %v328, %v320
    %v393 = vpack.c.b16 %v329, %v321
    %v394 = vpack.c.b16 %v330, %v322
    %v395 = vpack.c.b16 %v331, %v323
    %v396 = vpack.c.b16 %v332, %v324
    %461 = vmatprep.subr.bf16.mxu0 %v390
    %462 = vmatpush1.bf16.msra.mxu0 %v389
    %463 = vmatprep.subr.bf16.mxu0 %v382
    %464 = vmatpush1.bf16.msra.mxu0 %v381
    %465 = vmatprep.subr.bf16.mxu0 %v374
    %466 = vmatpush1.bf16.msra.mxu0 %v373
    %467 = vmatprep.subr.bf16.mxu0 %v366
    %468 = vmatpush1.bf16.msra.mxu0 %v365
    %469 = vmatprep.subr.bf16.mxu0 %v358
    %470 = vmatpush1.bf16.msra.mxu0 %v357
    %471 = vmatprep.subr.bf16.mxu0 %v350
    %472 = vmatpush1.bf16.msra.mxu0 %v349
    %473 = vmatprep.subr.bf16.mxu0 %v342
    %474 = vmatpush1.bf16.msra.mxu0 %v341
    %475 = vmatprep.subr.bf16.mxu0 %v334
    %476 = vmatpush1.bf16.msra.mxu0 %v333
    %477 = vmatprep.subr.bf16.mxu0 0
    %478 = vmatpush2.bf16.msra.mxu0 0
    %479 = vmatprep.subr.bf16.mxu0 0
    %480 = vmatpush2.bf16.msra.mxu0 0
    %481 = vmatprep.subr.bf16.mxu0 0
    %482 = vmatpush2.bf16.msra.mxu0 0
    %483 = vmatprep.subr.bf16.mxu0 0
    %484 = vmatpush2.bf16.msra.mxu0 0
    %485 = vmatprep.subr.bf16.mxu0 0
    %486 = vmatpush2.bf16.msra.mxu0 0
    %487 = vmatprep.subr.bf16.mxu0 0
    %488 = vmatpush2.bf16.msra.mxu0 0
    %489 = vmatprep.subr.bf16.mxu0 0
    %490 = vmatpush2.bf16.msra.mxu0 0
    %491 = vmatprep.subr.bf16.mxu0 0
    %492 = vmatpush2.bf16.msra.mxu0 0
    %493 = vmatprep.mubr.bf16.mxu0 0
    %494 = vmatmul.mubr.bf16.gmra.mxu0 %v34
    %v495 = vpop.f32.mrf.mxu0
    %v496 = vadd.f32 %v104, %v495
    %v497 = vpop.f32.mrf.mxu0
    %v498 = vadd.f32 %v108, %v497
    %v499 = vpop.f32.mrf.mxu0
    %v500 = vpop.f32.mrf.mxu0
    %501 = vdwg.mxu0
    %502 = vmatprep.subr.bf16.mxu0 %v392
    %503 = vmatpush1.bf16.msra.mxu0 %v391
    %504 = vmatprep.subr.bf16.mxu0 %v384
    %505 = vmatpush1.bf16.msra.mxu0 %v383
    %506 = vmatprep.subr.bf16.mxu0 %v376
    %507 = vmatpush1.bf16.msra.mxu0 %v375
    %508 = vmatprep.subr.bf16.mxu0 %v368
    %509 = vmatpush1.bf16.msra.mxu0 %v367
    %510 = vmatprep.subr.bf16.mxu0 %v360
    %511 = vmatpush1.bf16.msra.mxu0 %v359
    %512 = vmatprep.subr.bf16.mxu0 %v352
    %513 = vmatpush1.bf16.msra.mxu0 %v351
    %514 = vmatprep.subr.bf16.mxu0 %v344
    %515 = vmatpush1.bf16.msra.mxu0 %v343
    %516 = vmatprep.subr.bf16.mxu0 %v336
    %517 = vmatpush1.bf16.msra.mxu0 %v335
    %518 = vmatprep.subr.bf16.mxu0 0
    %519 = vmatpush2.bf16.msra.mxu0 0
    %520 = vmatprep.subr.bf16.mxu0 0
    %521 = vmatpush2.bf16.msra.mxu0 0
    %522 = vmatprep.subr.bf16.mxu0 0
    %523 = vmatpush2.bf16.msra.mxu0 0
    %524 = vmatprep.subr.bf16.mxu0 0
    %525 = vmatpush2.bf16.msra.mxu0 0
    %526 = vmatprep.subr.bf16.mxu0 0
    %527 = vmatpush2.bf16.msra.mxu0 0
    %528 = vmatprep.subr.bf16.mxu0 0
    %529 = vmatpush2.bf16.msra.mxu0 0
    %530 = vmatprep.subr.bf16.mxu0 0
    %531 = vmatpush2.bf16.msra.mxu0 0
    %532 = vmatprep.subr.bf16.mxu0 0
    %533 = vmatpush2.bf16.msra.mxu0 0
    %534 = vmatprep.mubr.bf16.mxu0 0
    %535 = vmatmul.mubr.bf16.gmra.mxu0 %v34
    %v536 = vpop.f32.mrf.mxu0
    %v537 = vadd.f32 %v112, %v536
    %v538 = vpop.f32.mrf.mxu0
    %v539 = vadd.f32 %v116, %v538
    %v540 = vpop.f32.mrf.mxu0
    %v541 = vpop.f32.mrf.mxu0
    %542 = vdwg.mxu0
    %543 = vmatprep.subr.bf16.mxu0 %v394
    %544 = vmatpush1.bf16.msra.mxu0 %v393
    %545 = vmatprep.subr.bf16.mxu0 %v386
    %546 = vmatpush1.bf16.msra.mxu0 %v385
    %547 = vmatprep.subr.bf16.mxu0 %v378
    %548 = vmatpush1.bf16.msra.mxu0 %v377
    %549 = vmatprep.subr.bf16.mxu0 %v370
    %550 = vmatpush1.bf16.msra.mxu0 %v369
    %551 = vmatprep.subr.bf16.mxu0 %v362
    %552 = vmatpush1.bf16.msra.mxu0 %v361
    %553 = vmatprep.subr.bf16.mxu0 %v354
    %554 = vmatpush1.bf16.msra.mxu0 %v353
    %555 = vmatprep.subr.bf16.mxu0 %v346
    %556 = vmatpush1.bf16.msra.mxu0 %v345
    %557 = vmatprep.subr.bf16.mxu0 %v338
    %558 = vmatpush1.bf16.msra.mxu0 %v337
    %559 = vmatprep.subr.bf16.mxu0 0
    %560 = vmatpush2.bf16.msra.mxu0 0
    %561 = vmatprep.subr.bf16.mxu0 0
    %562 = vmatpush2.bf16.msra.mxu0 0
    %563 = vmatprep.subr.bf16.mxu0 0
    %564 = vmatpush2.bf16.msra.mxu0 0
    %565 = vmatprep.subr.bf16.mxu0 0
    %566 = vmatpush2.bf16.msra.mxu0 0
    %567 = vmatprep.subr.bf16.mxu0 0
    %568 = vmatpush2.bf16.msra.mxu0 0
    %569 = vmatprep.subr.bf16.mxu0 0
    %570 = vmatpush2.bf16.msra.mxu0 0
    %571 = vmatprep.subr.bf16.mxu0 0
    %572 = vmatpush2.bf16.msra.mxu0 0
    %573 = vmatprep.subr.bf16.mxu0 0
    %574 = vmatpush2.bf16.msra.mxu0 0
    %575 = vmatprep.mubr.bf16.mxu0 0
    %576 = vmatmul.mubr.bf16.gmra.mxu0 %v34
    %v577 = vpop.f32.mrf.mxu0
    %v578 = vadd.f32 %v120, %v577
    %v579 = vpop.f32.mrf.mxu0
    %v580 = vadd.f32 %v124, %v579
    %v581 = vpop.f32.mrf.mxu0
    %v582 = vpop.f32.mrf.mxu0
    %583 = vdwg.mxu0
    %584 = vmatprep.subr.bf16.mxu0 %v396
    %585 = vmatpush1.bf16.msra.mxu0 %v395
    %586 = vmatprep.subr.bf16.mxu0 %v388
    %587 = vmatpush1.bf16.msra.mxu0 %v387
    %588 = vmatprep.subr.bf16.mxu0 %v380
    %589 = vmatpush1.bf16.msra.mxu0 %v379
    %590 = vmatprep.subr.bf16.mxu0 %v372
    %591 = vmatpush1.bf16.msra.mxu0 %v371
    %592 = vmatprep.subr.bf16.mxu0 %v364
    %593 = vmatpush1.bf16.msra.mxu0 %v363
    %594 = vmatprep.subr.bf16.mxu0 %v356
    %595 = vmatpush1.bf16.msra.mxu0 %v355
    %596 = vmatprep.subr.bf16.mxu0 %v348
    %597 = vmatpush1.bf16.msra.mxu0 %v347
    %598 = vmatprep.subr.bf16.mxu0 %v340
    %599 = vmatpush1.bf16.msra.mxu0 %v339
    %600 = vmatprep.subr.bf16.mxu0 0
    %601 = vmatpush2.bf16.msra.mxu0 0
    %602 = vmatprep.subr.bf16.mxu0 0
    %603 = vmatpush2.bf16.msra.mxu0 0
    %604 = vmatprep.subr.bf16.mxu0 0
    %605 = vmatpush2.bf16.msra.mxu0 0
    %606 = vmatprep.subr.bf16.mxu0 0
    %607 = vmatpush2.bf16.msra.mxu0 0
    %608 = vmatprep.subr.bf16.mxu0 0
    %609 = vmatpush2.bf16.msra.mxu0 0
    %610 = vmatprep.subr.bf16.mxu0 0
    %611 = vmatpush2.bf16.msra.mxu0 0
    %612 = vmatprep.subr.bf16.mxu0 0
    %613 = vmatpush2.bf16.msra.mxu0 0
    %614 = vmatprep.subr.bf16.mxu0 0
    %615 = vmatpush2.bf16.msra.mxu0 0
    %616 = vmatprep.mubr.bf16.mxu0 0
    %617 = vmatmul.mubr.bf16.gmra.mxu0 %v34
    %v618 = vpop.f32.mrf.mxu0
    %v619 = vadd.f32 %v128, %v618
    %v620 = vpop.f32.mrf.mxu0
    %v621 = vadd.f32 %v132, %v620
    %v622 = vpop.f32.mrf.mxu0
    %v623 = vpop.f32.mrf.mxu0
    %624 = vdwg.mxu0
    %vm625 = vcmp.ge.f32.partialorder %v496, 0.0
    %vm626 = vcmp.ge.f32.partialorder %v498, 0.0
    %vm627 = vcmp.ge.f32.partialorder %v537, 0.0
    %vm628 = vcmp.ge.f32.partialorder %v539, 0.0
    %vm629 = vcmp.ge.f32.partialorder %v578, 0.0
    %vm630 = vcmp.ge.f32.partialorder %v580, 0.0
    %vm631 = vcmp.ge.f32.partialorder %v619, 0.0
    %vm632 = vcmp.ge.f32.partialorder %v621, 0.0
    %v633 = vmul.f32 %v496, 0.2
    %v634 = vmul.f32 %v498, 0.2
    %v635 = vmul.f32 %v537, 0.2
    %v636 = vmul.f32 %v539, 0.2
    %v637 = vmul.f32 %v578, 0.2
    %v638 = vmul.f32 %v580, 0.2
    %v639 = vmul.f32 %v619, 0.2
    %v640 = vmul.f32 %v621, 0.2
    %v641 = vsel %vm625, %v496, %v633
    %v642 = vsel %vm626, %v498, %v634
    %v643 = vsel %vm627, %v537, %v635
    %v644 = vsel %vm628, %v539, %v636
    %v645 = vsel %vm629, %v578, %v637
    %v646 = vsel %vm630, %v580, %v638
    %v647 = vsel %vm631, %v619, %v639
    %v648 = vsel %vm632, %v621, %v640
    %v649 = vpack.c.bf16 %v641, %v641
    %v650 = vpack.c.bf16 %v642, %v642
    %v651 = vpack.c.bf16 %v643, %v643
    %v652 = vpack.c.bf16 %v644, %v644
    %v653 = vpack.c.bf16 %v645, %v645
    %v654 = vpack.c.bf16 %v646, %v646
    %v655 = vpack.c.bf16 %v647, %v647
    %v656 = vpack.c.bf16 %v648, %v648
    %v657 = vld [vmem:[%s3] sm:$0xff]
    %v658 = vld [vmem:[%s3 + $0x8] sm:$0xff]
    %v659 = vld [vmem:[%s3 + $0x10] sm:$0xff]
    %v660 = vld [vmem:[%s3 + $0x18] sm:$0xff]
    %v661 = vld [vmem:[%s3 + $0x20] sm:$0xff]
    %v662 = vld [vmem:[%s3 + $0x28] sm:$0xff]
    %v663 = vld [vmem:[%s3 + $0x30] sm:$0xff]
    %v664 = vld [vmem:[%s3 + $0x38] sm:$0xff]
    %v665 = vld [vmem:[%s3 + $0x40] sm:$0xff]
    %v666 = vld [vmem:[%s3 + $0x48] sm:$0xff]
    %v667 = vld [vmem:[%s3 + $0x50] sm:$0xff]
    %v668 = vld [vmem:[%s3 + $0x58] sm:$0xff]
    %v669 = vld [vmem:[%s3 + $0x60] sm:$0xff]
    %v670 = vld [vmem:[%s3 + $0x68] sm:$0xff]
    %v671 = vld [vmem:[%s3 + $0x70] sm:$0xff]
    %v672 = vld [vmem:[%s3 + $0x78] sm:$0xff]
    %v673 = vld [vmem:[%s3 + $0x80] sm:$0xff]
    %v674 = vld [vmem:[%s3 + $0x88] sm:$0xff]
    %v675 = vld [vmem:[%s3 + $0x90] sm:$0xff]
    %v676 = vld [vmem:[%s3 + $0x98] sm:$0xff]
    %v677 = vld [vmem:[%s3 + $0xa0] sm:$0xff]
    %v678 = vld [vmem:[%s3 + $0xa8] sm:$0xff]
    %v679 = vld [vmem:[%s3 + $0xb0] sm:$0xff]
    %v680 = vld [vmem:[%s3 + $0xb8] sm:$0xff]
    %v681 = vld [vmem:[%s3 + $0xc0] sm:$0xff]
    %v682 = vld [vmem:[%s3 + $0xc8] sm:$0xff]
    %v683 = vld [vmem:[%s3 + $0xd0] sm:$0xff]
    %v684 = vld [vmem:[%s3 + $0xd8] sm:$0xff]
    %v685 = vld [vmem:[%s3 + $0xe0] sm:$0xff]
    %v686 = vld [vmem:[%s3 + $0xe8] sm:$0xff]
    %v687 = vld [vmem:[%s3 + $0xf0] sm:$0xff]
    %v688 = vld [vmem:[%s3 + $0xf8] sm:$0xff]
    %v689 = vld [vmem:[%s3 + $0x100] sm:$0xff]
    %v690 = vld [vmem:[%s3 + $0x108] sm:$0xff]
    %v691 = vld [vmem:[%s3 + $0x110] sm:$0xff]
    %v692 = vld [vmem:[%s3 + $0x118] sm:$0xff]
    %v693 = vld [vmem:[%s3 + $0x120] sm:$0xff]
    %v694 = vld [vmem:[%s3 + $0x128] sm:$0xff]
    %v695 = vld [vmem:[%s3 + $0x130] sm:$0xff]
    %v696 = vld [vmem:[%s3 + $0x138] sm:$0xff]
    %v697 = vld [vmem:[%s3 + $0x140] sm:$0xff]
    %v698 = vld [vmem:[%s3 + $0x148] sm:$0xff]
    %v699 = vld [vmem:[%s3 + $0x150] sm:$0xff]
    %v700 = vld [vmem:[%s3 + $0x158] sm:$0xff]
    %v701 = vld [vmem:[%s3 + $0x160] sm:$0xff]
    %v702 = vld [vmem:[%s3 + $0x168] sm:$0xff]
    %v703 = vld [vmem:[%s3 + $0x170] sm:$0xff]
    %v704 = vld [vmem:[%s3 + $0x178] sm:$0xff]
    %v705 = vld [vmem:[%s3 + $0x180] sm:$0xff]
    %v706 = vld [vmem:[%s3 + $0x188] sm:$0xff]
    %v707 = vld [vmem:[%s3 + $0x190] sm:$0xff]
    %v708 = vld [vmem:[%s3 + $0x198] sm:$0xff]
    %v709 = vld [vmem:[%s3 + $0x1a0] sm:$0xff]
    %v710 = vld [vmem:[%s3 + $0x1a8] sm:$0xff]
    %v711 = vld [vmem:[%s3 + $0x1b0] sm:$0xff]
    %v712 = vld [vmem:[%s3 + $0x1b8] sm:$0xff]
    %v713 = vld [vmem:[%s3 + $0x1c0] sm:$0xff]
    %v714 = vld [vmem:[%s3 + $0x1c8] sm:$0xff]
    %v715 = vld [vmem:[%s3 + $0x1d0] sm:$0xff]
    %v716 = vld [vmem:[%s3 + $0x1d8] sm:$0xff]
    %v717 = vld [vmem:[%s3 + $0x1e0] sm:$0xff]
    %v718 = vld [vmem:[%s3 + $0x1e8] sm:$0xff]
    %v719 = vld [vmem:[%s3 + $0x1f0] sm:$0xff]
    %v720 = vld [vmem:[%s3 + $0x1f8] sm:$0xff]
    %v721 = vld [vmem:[%s3 + $0x200] sm:$0xff]
    %v722 = vld [vmem:[%s3 + $0x208] sm:$0xff]
    %v723 = vld [vmem:[%s3 + $0x210] sm:$0xff]
    %v724 = vld [vmem:[%s3 + $0x218] sm:$0xff]
    %v725 = vld [vmem:[%s3 + $0x220] sm:$0xff]
    %v726 = vld [vmem:[%s3 + $0x228] sm:$0xff]
    %v727 = vld [vmem:[%s3 + $0x230] sm:$0xff]
    %v728 = vld [vmem:[%s3 + $0x238] sm:$0xff]
    %v729 = vld [vmem:[%s3 + $0x240] sm:$0xff]
    %v730 = vld [vmem:[%s3 + $0x248] sm:$0xff]
    %v731 = vld [vmem:[%s3 + $0x250] sm:$0xff]
    %v732 = vld [vmem:[%s3 + $0x258] sm:$0xff]
    %v733 = vld [vmem:[%s3 + $0x260] sm:$0xff]
    %v734 = vld [vmem:[%s3 + $0x268] sm:$0xff]
    %v735 = vld [vmem:[%s3 + $0x270] sm:$0xff]
    %v736 = vld [vmem:[%s3 + $0x278] sm:$0xff]
    %v737 = vld [vmem:[%s3 + $0x280] sm:$0xff]
    %v738 = vld [vmem:[%s3 + $0x288] sm:$0xff]
    %v739 = vld [vmem:[%s3 + $0x290] sm:$0xff]
    %v740 = vld [vmem:[%s3 + $0x298] sm:$0xff]
    %v741 = vld [vmem:[%s3 + $0x2a0] sm:$0xff]
    %v742 = vld [vmem:[%s3 + $0x2a8] sm:$0xff]
    %v743 = vld [vmem:[%s3 + $0x2b0] sm:$0xff]
    %v744 = vld [vmem:[%s3 + $0x2b8] sm:$0xff]
    %v745 = vld [vmem:[%s3 + $0x2c0] sm:$0xff]
    %v746 = vld [vmem:[%s3 + $0x2c8] sm:$0xff]
    %v747 = vld [vmem:[%s3 + $0x2d0] sm:$0xff]
    %v748 = vld [vmem:[%s3 + $0x2d8] sm:$0xff]
    %v749 = vld [vmem:[%s3 + $0x2e0] sm:$0xff]
    %v750 = vld [vmem:[%s3 + $0x2e8] sm:$0xff]
    %v751 = vld [vmem:[%s3 + $0x2f0] sm:$0xff]
    %v752 = vld [vmem:[%s3 + $0x2f8] sm:$0xff]
    %v753 = vld [vmem:[%s3 + $0x300] sm:$0xff]
    %v754 = vld [vmem:[%s3 + $0x308] sm:$0xff]
    %v755 = vld [vmem:[%s3 + $0x310] sm:$0xff]
    %v756 = vld [vmem:[%s3 + $0x318] sm:$0xff]
    %v757 = vld [vmem:[%s3 + $0x320] sm:$0xff]
    %v758 = vld [vmem:[%s3 + $0x328] sm:$0xff]
    %v759 = vld [vmem:[%s3 + $0x330] sm:$0xff]
    %v760 = vld [vmem:[%s3 + $0x338] sm:$0xff]
    %v761 = vld [vmem:[%s3 + $0x340] sm:$0xff]
    %v762 = vld [vmem:[%s3 + $0x348] sm:$0xff]
    %v763 = vld [vmem:[%s3 + $0x350] sm:$0xff]
    %v764 = vld [vmem:[%s3 + $0x358] sm:$0xff]
    %v765 = vld [vmem:[%s3 + $0x360] sm:$0xff]
    %v766 = vld [vmem:[%s3 + $0x368] sm:$0xff]
    %v767 = vld [vmem:[%s3 + $0x370] sm:$0xff]
    %v768 = vld [vmem:[%s3 + $0x378] sm:$0xff]
    %v769 = vld [vmem:[%s3 + $0x380] sm:$0xff]
    %v770 = vld [vmem:[%s3 + $0x388] sm:$0xff]
    %v771 = vld [vmem:[%s3 + $0x390] sm:$0xff]
    %v772 = vld [vmem:[%s3 + $0x398] sm:$0xff]
    %v773 = vld [vmem:[%s3 + $0x3a0] sm:$0xff]
    %v774 = vld [vmem:[%s3 + $0x3a8] sm:$0xff]
    %v775 = vld [vmem:[%s3 + $0x3b0] sm:$0xff]
    %v776 = vld [vmem:[%s3 + $0x3b8] sm:$0xff]
    %v777 = vld [vmem:[%s3 + $0x3c0] sm:$0xff]
    %v778 = vld [vmem:[%s3 + $0x3c8] sm:$0xff]
    %v779 = vld [vmem:[%s3 + $0x3d0] sm:$0xff]
    %v780 = vld [vmem:[%s3 + $0x3d8] sm:$0xff]
    %v781 = vld [vmem:[%s3 + $0x3e0] sm:$0xff]
    %v782 = vld [vmem:[%s3 + $0x3e8] sm:$0xff]
    %v783 = vld [vmem:[%s3 + $0x3f0] sm:$0xff]
    %v784 = vld [vmem:[%s3 + $0x3f8] sm:$0xff]
    %v785 = vld [vmem:[%s3 + $0x400] sm:$0xff]
    %v786 = vld [vmem:[%s3 + $0x408] sm:$0xff]
    %v787 = vld [vmem:[%s3 + $0x410] sm:$0xff]
    %v788 = vld [vmem:[%s3 + $0x418] sm:$0xff]
    %v789 = vld [vmem:[%s3 + $0x420] sm:$0xff]
    %v790 = vld [vmem:[%s3 + $0x428] sm:$0xff]
    %v791 = vld [vmem:[%s3 + $0x430] sm:$0xff]
    %v792 = vld [vmem:[%s3 + $0x438] sm:$0xff]
    %v793 = vld [vmem:[%s3 + $0x440] sm:$0xff]
    %v794 = vld [vmem:[%s3 + $0x448] sm:$0xff]
    %v795 = vld [vmem:[%s3 + $0x450] sm:$0xff]
    %v796 = vld [vmem:[%s3 + $0x458] sm:$0xff]
    %v797 = vld [vmem:[%s3 + $0x460] sm:$0xff]
    %v798 = vld [vmem:[%s3 + $0x468] sm:$0xff]
    %v799 = vld [vmem:[%s3 + $0x470] sm:$0xff]
    %v800 = vld [vmem:[%s3 + $0x478] sm:$0xff]
    %v801 = vld [vmem:[%s3 + $0x480] sm:$0xff]
    %v802 = vld [vmem:[%s3 + $0x488] sm:$0xff]
    %v803 = vld [vmem:[%s3 + $0x490] sm:$0xff]
    %v804 = vld [vmem:[%s3 + $0x498] sm:$0xff]
    %v805 = vld [vmem:[%s3 + $0x4a0] sm:$0xff]
    %v806 = vld [vmem:[%s3 + $0x4a8] sm:$0xff]
    %v807 = vld [vmem:[%s3 + $0x4b0] sm:$0xff]
    %v808 = vld [vmem:[%s3 + $0x4b8] sm:$0xff]
    %v809 = vld [vmem:[%s3 + $0x4c0] sm:$0xff]
    %v810 = vld [vmem:[%s3 + $0x4c8] sm:$0xff]
    %v811 = vld [vmem:[%s3 + $0x4d0] sm:$0xff]
    %v812 = vld [vmem:[%s3 + $0x4d8] sm:$0xff]
    %v813 = vld [vmem:[%s3 + $0x4e0] sm:$0xff]
    %v814 = vld [vmem:[%s3 + $0x4e8] sm:$0xff]
    %v815 = vld [vmem:[%s3 + $0x4f0] sm:$0xff]
    %v816 = vld [vmem:[%s3 + $0x4f8] sm:$0xff]
    %v817 = vld [vmem:[%s3 + $0x500] sm:$0xff]
    %v818 = vld [vmem:[%s3 + $0x508] sm:$0xff]
    %v819 = vld [vmem:[%s3 + $0x510] sm:$0xff]
    %v820 = vld [vmem:[%s3 + $0x518] sm:$0xff]
    %v821 = vld [vmem:[%s3 + $0x520] sm:$0xff]
    %v822 = vld [vmem:[%s3 + $0x528] sm:$0xff]
    %v823 = vld [vmem:[%s3 + $0x530] sm:$0xff]
    %v824 = vld [vmem:[%s3 + $0x538] sm:$0xff]
    %v825 = vld [vmem:[%s3 + $0x540] sm:$0xff]
    %v826 = vld [vmem:[%s3 + $0x548] sm:$0xff]
    %v827 = vld [vmem:[%s3 + $0x550] sm:$0xff]
    %v828 = vld [vmem:[%s3 + $0x558] sm:$0xff]
    %v829 = vld [vmem:[%s3 + $0x560] sm:$0xff]
    %v830 = vld [vmem:[%s3 + $0x568] sm:$0xff]
    %v831 = vld [vmem:[%s3 + $0x570] sm:$0xff]
    %v832 = vld [vmem:[%s3 + $0x578] sm:$0xff]
    %v833 = vld [vmem:[%s3 + $0x580] sm:$0xff]
    %v834 = vld [vmem:[%s3 + $0x588] sm:$0xff]
    %v835 = vld [vmem:[%s3 + $0x590] sm:$0xff]
    %v836 = vld [vmem:[%s3 + $0x598] sm:$0xff]
    %v837 = vld [vmem:[%s3 + $0x5a0] sm:$0xff]
    %v838 = vld [vmem:[%s3 + $0x5a8] sm:$0xff]
    %v839 = vld [vmem:[%s3 + $0x5b0] sm:$0xff]
    %v840 = vld [vmem:[%s3 + $0x5b8] sm:$0xff]
    %v841 = vld [vmem:[%s3 + $0x5c0] sm:$0xff]
    %v842 = vld [vmem:[%s3 + $0x5c8] sm:$0xff]
    %v843 = vld [vmem:[%s3 + $0x5d0] sm:$0xff]
    %v844 = vld [vmem:[%s3 + $0x5d8] sm:$0xff]
    %v845 = vld [vmem:[%s3 + $0x5e0] sm:$0xff]
    %v846 = vld [vmem:[%s3 + $0x5e8] sm:$0xff]
    %v847 = vld [vmem:[%s3 + $0x5f0] sm:$0xff]
    %v848 = vld [vmem:[%s3 + $0x5f8] sm:$0xff]
    %v849 = vld [vmem:[%s3 + $0x600] sm:$0xff]
    %v850 = vld [vmem:[%s3 + $0x608] sm:$0xff]
    %v851 = vld [vmem:[%s3 + $0x610] sm:$0xff]
    %v852 = vld [vmem:[%s3 + $0x618] sm:$0xff]
    %v853 = vld [vmem:[%s3 + $0x620] sm:$0xff]
    %v854 = vld [vmem:[%s3 + $0x628] sm:$0xff]
    %v855 = vld [vmem:[%s3 + $0x630] sm:$0xff]
    %v856 = vld [vmem:[%s3 + $0x638] sm:$0xff]
    %v857 = vld [vmem:[%s3 + $0x640] sm:$0xff]
    %v858 = vld [vmem:[%s3 + $0x648] sm:$0xff]
    %v859 = vld [vmem:[%s3 + $0x650] sm:$0xff]
    %v860 = vld [vmem:[%s3 + $0x658] sm:$0xff]
    %v861 = vld [vmem:[%s3 + $0x660] sm:$0xff]
    %v862 = vld [vmem:[%s3 + $0x668] sm:$0xff]
    %v863 = vld [vmem:[%s3 + $0x670] sm:$0xff]
    %v864 = vld [vmem:[%s3 + $0x678] sm:$0xff]
    %v865 = vld [vmem:[%s3 + $0x680] sm:$0xff]
    %v866 = vld [vmem:[%s3 + $0x688] sm:$0xff]
    %v867 = vld [vmem:[%s3 + $0x690] sm:$0xff]
    %v868 = vld [vmem:[%s3 + $0x698] sm:$0xff]
    %v869 = vld [vmem:[%s3 + $0x6a0] sm:$0xff]
    %v870 = vld [vmem:[%s3 + $0x6a8] sm:$0xff]
    %v871 = vld [vmem:[%s3 + $0x6b0] sm:$0xff]
    %v872 = vld [vmem:[%s3 + $0x6b8] sm:$0xff]
    %v873 = vld [vmem:[%s3 + $0x6c0] sm:$0xff]
    %v874 = vld [vmem:[%s3 + $0x6c8] sm:$0xff]
    %v875 = vld [vmem:[%s3 + $0x6d0] sm:$0xff]
    %v876 = vld [vmem:[%s3 + $0x6d8] sm:$0xff]
    %v877 = vld [vmem:[%s3 + $0x6e0] sm:$0xff]
    %v878 = vld [vmem:[%s3 + $0x6e8] sm:$0xff]
    %v879 = vld [vmem:[%s3 + $0x6f0] sm:$0xff]
    %v880 = vld [vmem:[%s3 + $0x6f8] sm:$0xff]
    %v881 = vld [vmem:[%s3 + $0x700] sm:$0xff]
    %v882 = vld [vmem:[%s3 + $0x708] sm:$0xff]
    %v883 = vld [vmem:[%s3 + $0x710] sm:$0xff]
    %v884 = vld [vmem:[%s3 + $0x718] sm:$0xff]
    %v885 = vld [vmem:[%s3 + $0x720] sm:$0xff]
    %v886 = vld [vmem:[%s3 + $0x728] sm:$0xff]
    %v887 = vld [vmem:[%s3 + $0x730] sm:$0xff]
    %v888 = vld [vmem:[%s3 + $0x738] sm:$0xff]
    %v889 = vld [vmem:[%s3 + $0x740] sm:$0xff]
    %v890 = vld [vmem:[%s3 + $0x748] sm:$0xff]
    %v891 = vld [vmem:[%s3 + $0x750] sm:$0xff]
    %v892 = vld [vmem:[%s3 + $0x758] sm:$0xff]
    %v893 = vld [vmem:[%s3 + $0x760] sm:$0xff]
    %v894 = vld [vmem:[%s3 + $0x768] sm:$0xff]
    %v895 = vld [vmem:[%s3 + $0x770] sm:$0xff]
    %v896 = vld [vmem:[%s3 + $0x778] sm:$0xff]
    %v897 = vld [vmem:[%s3 + $0x780] sm:$0xff]
    %v898 = vld [vmem:[%s3 + $0x788] sm:$0xff]
    %v899 = vld [vmem:[%s3 + $0x790] sm:$0xff]
    %v900 = vld [vmem:[%s3 + $0x798] sm:$0xff]
    %v901 = vld [vmem:[%s3 + $0x7a0] sm:$0xff]
    %v902 = vld [vmem:[%s3 + $0x7a8] sm:$0xff]
    %v903 = vld [vmem:[%s3 + $0x7b0] sm:$0xff]
    %v904 = vld [vmem:[%s3 + $0x7b8] sm:$0xff]
    %v905 = vld [vmem:[%s3 + $0x7c0] sm:$0xff]
    %v906 = vld [vmem:[%s3 + $0x7c8] sm:$0xff]
    %v907 = vld [vmem:[%s3 + $0x7d0] sm:$0xff]
    %v908 = vld [vmem:[%s3 + $0x7d8] sm:$0xff]
    %v909 = vld [vmem:[%s3 + $0x7e0] sm:$0xff]
    %v910 = vld [vmem:[%s3 + $0x7e8] sm:$0xff]
    %v911 = vld [vmem:[%s3 + $0x7f0] sm:$0xff]
    %v912 = vld [vmem:[%s3 + $0x7f8] sm:$0xff]
    %v913 = vld [vmem:[%s4] sm:$0xf]
    %v915 = vlaneseq
    %v916 = vshrl.u32 %v915, 7
    %v917 = vsub.s32 0, %v916
    %v918 = vrot.slane %v913, %v917
    %v919 = vlaneseq
    %v920 = vshrl.u32 %v919, 7
    %v921 = vsub.s32 1, %v920
    %v922 = vrot.slane %v913, %v921
    %v923 = vlaneseq
    %v924 = vshrl.u32 %v923, 7
    %v925 = vsub.s32 2, %v924
    %v926 = vrot.slane %v913, %v925
    %v927 = vlaneseq
    %v928 = vshrl.u32 %v927, 7
    %v929 = vsub.s32 3, %v928
    %v930 = vrot.slane %v913, %v929
    %v1191 = vunpack.c.l.b16 %v657
    %v1192 = vunpack.c.h.b16 %v657
    %v1193 = vunpack.c.l.b16 %v658
    %v1194 = vunpack.c.h.b16 %v658
    %v1195 = vunpack.c.l.b16 %v659
    %v1196 = vunpack.c.h.b16 %v659
    %v1197 = vunpack.c.l.b16 %v660
    %v1198 = vunpack.c.h.b16 %v660
    %v1199 = vunpack.c.l.b16 %v661
    %v1200 = vunpack.c.h.b16 %v661
    %v1201 = vunpack.c.l.b16 %v662
    %v1202 = vunpack.c.h.b16 %v662
    %v1203 = vunpack.c.l.b16 %v663
    %v1204 = vunpack.c.h.b16 %v663
    %v1205 = vunpack.c.l.b16 %v664
    %v1206 = vunpack.c.h.b16 %v664
    %v1207 = vunpack.c.l.b16 %v665
    %v1208 = vunpack.c.h.b16 %v665
    %v1209 = vunpack.c.l.b16 %v666
    %v1210 = vunpack.c.h.b16 %v666
    %v1211 = vunpack.c.l.b16 %v667
    %v1212 = vunpack.c.h.b16 %v667
    %v1213 = vunpack.c.l.b16 %v668
    %v1214 = vunpack.c.h.b16 %v668
    %v1215 = vunpack.c.l.b16 %v669
    %v1216 = vunpack.c.h.b16 %v669
    %v1217 = vunpack.c.l.b16 %v670
    %v1218 = vunpack.c.h.b16 %v670
    %v1219 = vunpack.c.l.b16 %v671
    %v1220 = vunpack.c.h.b16 %v671
    %v1221 = vunpack.c.l.b16 %v672
    %v1222 = vunpack.c.h.b16 %v672
    %v1223 = vunpack.c.l.b16 %v673
    %v1224 = vunpack.c.h.b16 %v673
    %v1225 = vunpack.c.l.b16 %v674
    %v1226 = vunpack.c.h.b16 %v674
    %v1227 = vunpack.c.l.b16 %v675
    %v1228 = vunpack.c.h.b16 %v675
    %v1229 = vunpack.c.l.b16 %v676
    %v1230 = vunpack.c.h.b16 %v676
    %v1231 = vunpack.c.l.b16 %v677
    %v1232 = vunpack.c.h.b16 %v677
    %v1233 = vunpack.c.l.b16 %v678
    %v1234 = vunpack.c.h.b16 %v678
    %v1235 = vunpack.c.l.b16 %v679
    %v1236 = vunpack.c.h.b16 %v679
    %v1237 = vunpack.c.l.b16 %v680
    %v1238 = vunpack.c.h.b16 %v680
    %v1239 = vunpack.c.l.b16 %v681
    %v1240 = vunpack.c.h.b16 %v681
    %v1241 = vunpack.c.l.b16 %v682
    %v1242 = vunpack.c.h.b16 %v682
    %v1243 = vunpack.c.l.b16 %v683
    %v1244 = vunpack.c.h.b16 %v683
    %v1245 = vunpack.c.l.b16 %v684
    %v1246 = vunpack.c.h.b16 %v684
    %v1247 = vunpack.c.l.b16 %v685
    %v1248 = vunpack.c.h.b16 %v685
    %v1249 = vunpack.c.l.b16 %v686
    %v1250 = vunpack.c.h.b16 %v686
    %v1251 = vunpack.c.l.b16 %v687
    %v1252 = vunpack.c.h.b16 %v687
    %v1253 = vunpack.c.l.b16 %v688
    %v1254 = vunpack.c.h.b16 %v688
    %v1255 = vunpack.c.l.b16 %v689
    %v1256 = vunpack.c.h.b16 %v689
    %v1257 = vunpack.c.l.b16 %v690
    %v1258 = vunpack.c.h.b16 %v690
    %v1259 = vunpack.c.l.b16 %v691
    %v1260 = vunpack.c.h.b16 %v691
    %v1261 = vunpack.c.l.b16 %v692
    %v1262 = vunpack.c.h.b16 %v692
    %v1263 = vunpack.c.l.b16 %v693
    %v1264 = vunpack.c.h.b16 %v693
    %v1265 = vunpack.c.l.b16 %v694
    %v1266 = vunpack.c.h.b16 %v694
    %v1267 = vunpack.c.l.b16 %v695
    %v1268 = vunpack.c.h.b16 %v695
    %v1269 = vunpack.c.l.b16 %v696
    %v1270 = vunpack.c.h.b16 %v696
    %v1271 = vunpack.c.l.b16 %v697
    %v1272 = vunpack.c.h.b16 %v697
    %v1273 = vunpack.c.l.b16 %v698
    %v1274 = vunpack.c.h.b16 %v698
    %v1275 = vunpack.c.l.b16 %v699
    %v1276 = vunpack.c.h.b16 %v699
    %v1277 = vunpack.c.l.b16 %v700
    %v1278 = vunpack.c.h.b16 %v700
    %v1279 = vunpack.c.l.b16 %v701
    %v1280 = vunpack.c.h.b16 %v701
    %v1281 = vunpack.c.l.b16 %v702
    %v1282 = vunpack.c.h.b16 %v702
    %v1283 = vunpack.c.l.b16 %v703
    %v1284 = vunpack.c.h.b16 %v703
    %v1285 = vunpack.c.l.b16 %v704
    %v1286 = vunpack.c.h.b16 %v704
    %v1287 = vunpack.c.l.b16 %v705
    %v1288 = vunpack.c.h.b16 %v705
    %v1289 = vunpack.c.l.b16 %v706
    %v1290 = vunpack.c.h.b16 %v706
    %v1291 = vunpack.c.l.b16 %v707
    %v1292 = vunpack.c.h.b16 %v707
    %v1293 = vunpack.c.l.b16 %v708
    %v1294 = vunpack.c.h.b16 %v708
    %v1295 = vunpack.c.l.b16 %v709
    %v1296 = vunpack.c.h.b16 %v709
    %v1297 = vunpack.c.l.b16 %v710
    %v1298 = vunpack.c.h.b16 %v710
    %v1299 = vunpack.c.l.b16 %v711
    %v1300 = vunpack.c.h.b16 %v711
    %v1301 = vunpack.c.l.b16 %v712
    %v1302 = vunpack.c.h.b16 %v712
    %v1303 = vunpack.c.l.b16 %v713
    %v1304 = vunpack.c.h.b16 %v713
    %v1305 = vunpack.c.l.b16 %v714
    %v1306 = vunpack.c.h.b16 %v714
    %v1307 = vunpack.c.l.b16 %v715
    %v1308 = vunpack.c.h.b16 %v715
    %v1309 = vunpack.c.l.b16 %v716
    %v1310 = vunpack.c.h.b16 %v716
    %v1311 = vunpack.c.l.b16 %v717
    %v1312 = vunpack.c.h.b16 %v717
    %v1313 = vunpack.c.l.b16 %v718
    %v1314 = vunpack.c.h.b16 %v718
    %v1315 = vunpack.c.l.b16 %v719
    %v1316 = vunpack.c.h.b16 %v719
    %v1317 = vunpack.c.l.b16 %v720
    %v1318 = vunpack.c.h.b16 %v720
    %v1319 = vunpack.c.l.b16 %v721
    %v1320 = vunpack.c.h.b16 %v721
    %v1321 = vunpack.c.l.b16 %v722
    %v1322 = vunpack.c.h.b16 %v722
    %v1323 = vunpack.c.l.b16 %v723
    %v1324 = vunpack.c.h.b16 %v723
    %v1325 = vunpack.c.l.b16 %v724
    %v1326 = vunpack.c.h.b16 %v724
    %v1327 = vunpack.c.l.b16 %v725
    %v1328 = vunpack.c.h.b16 %v725
    %v1329 = vunpack.c.l.b16 %v726
    %v1330 = vunpack.c.h.b16 %v726
    %v1331 = vunpack.c.l.b16 %v727
    %v1332 = vunpack.c.h.b16 %v727
    %v1333 = vunpack.c.l.b16 %v728
    %v1334 = vunpack.c.h.b16 %v728
    %v1335 = vunpack.c.l.b16 %v729
    %v1336 = vunpack.c.h.b16 %v729
    %v1337 = vunpack.c.l.b16 %v730
    %v1338 = vunpack.c.h.b16 %v730
    %v1339 = vunpack.c.l.b16 %v731
    %v1340 = vunpack.c.h.b16 %v731
    %v1341 = vunpack.c.l.b16 %v732
    %v1342 = vunpack.c.h.b16 %v732
    %v1343 = vunpack.c.l.b16 %v733
    %v1344 = vunpack.c.h.b16 %v733
    %v1345 = vunpack.c.l.b16 %v734
    %v1346 = vunpack.c.h.b16 %v734
    %v1347 = vunpack.c.l.b16 %v735
    %v1348 = vunpack.c.h.b16 %v735
    %v1349 = vunpack.c.l.b16 %v736
    %v1350 = vunpack.c.h.b16 %v736
    %v1351 = vunpack.c.l.b16 %v737
    %v1352 = vunpack.c.h.b16 %v737
    %v1353 = vunpack.c.l.b16 %v738
    %v1354 = vunpack.c.h.b16 %v738
    %v1355 = vunpack.c.l.b16 %v739
    %v1356 = vunpack.c.h.b16 %v739
    %v1357 = vunpack.c.l.b16 %v740
    %v1358 = vunpack.c.h.b16 %v740
    %v1359 = vunpack.c.l.b16 %v741
    %v1360 = vunpack.c.h.b16 %v741
    %v1361 = vunpack.c.l.b16 %v742
    %v1362 = vunpack.c.h.b16 %v742
    %v1363 = vunpack.c.l.b16 %v743
    %v1364 = vunpack.c.h.b16 %v743
    %v1365 = vunpack.c.l.b16 %v744
    %v1366 = vunpack.c.h.b16 %v744
    %v1367 = vunpack.c.l.b16 %v745
    %v1368 = vunpack.c.h.b16 %v745
    %v1369 = vunpack.c.l.b16 %v746
    %v1370 = vunpack.c.h.b16 %v746
    %v1371 = vunpack.c.l.b16 %v747
    %v1372 = vunpack.c.h.b16 %v747
    %v1373 = vunpack.c.l.b16 %v748
    %v1374 = vunpack.c.h.b16 %v748
    %v1375 = vunpack.c.l.b16 %v749
    %v1376 = vunpack.c.h.b16 %v749
    %v1377 = vunpack.c.l.b16 %v750
    %v1378 = vunpack.c.h.b16 %v750
    %v1379 = vunpack.c.l.b16 %v751
    %v1380 = vunpack.c.h.b16 %v751
    %v1381 = vunpack.c.l.b16 %v752
    %v1382 = vunpack.c.h.b16 %v752
    %v1383 = vunpack.c.l.b16 %v753
    %v1384 = vunpack.c.h.b16 %v753
    %v1385 = vunpack.c.l.b16 %v754
    %v1386 = vunpack.c.h.b16 %v754
    %v1387 = vunpack.c.l.b16 %v755
    %v1388 = vunpack.c.h.b16 %v755
    %v1389 = vunpack.c.l.b16 %v756
    %v1390 = vunpack.c.h.b16 %v756
    %v1391 = vunpack.c.l.b16 %v757
    %v1392 = vunpack.c.h.b16 %v757
    %v1393 = vunpack.c.l.b16 %v758
    %v1394 = vunpack.c.h.b16 %v758
    %v1395 = vunpack.c.l.b16 %v759
    %v1396 = vunpack.c.h.b16 %v759
    %v1397 = vunpack.c.l.b16 %v760
    %v1398 = vunpack.c.h.b16 %v760
    %v1399 = vunpack.c.l.b16 %v761
    %v1400 = vunpack.c.h.b16 %v761
    %v1401 = vunpack.c.l.b16 %v762
    %v1402 = vunpack.c.h.b16 %v762
    %v1403 = vunpack.c.l.b16 %v763
    %v1404 = vunpack.c.h.b16 %v763
    %v1405 = vunpack.c.l.b16 %v764
    %v1406 = vunpack.c.h.b16 %v764
    %v1407 = vunpack.c.l.b16 %v765
    %v1408 = vunpack.c.h.b16 %v765
    %v1409 = vunpack.c.l.b16 %v766
    %v1410 = vunpack.c.h.b16 %v766
    %v1411 = vunpack.c.l.b16 %v767
    %v1412 = vunpack.c.h.b16 %v767
    %v1413 = vunpack.c.l.b16 %v768
    %v1414 = vunpack.c.h.b16 %v768
    %v1415 = vunpack.c.l.b16 %v769
    %v1416 = vunpack.c.h.b16 %v769
    %v1417 = vunpack.c.l.b16 %v770
    %v1418 = vunpack.c.h.b16 %v770
    %v1419 = vunpack.c.l.b16 %v771
    %v1420 = vunpack.c.h.b16 %v771
    %v1421 = vunpack.c.l.b16 %v772
    %v1422 = vunpack.c.h.b16 %v772
    %v1423 = vunpack.c.l.b16 %v773
    %v1424 = vunpack.c.h.b16 %v773
    %v1425 = vunpack.c.l.b16 %v774
    %v1426 = vunpack.c.h.b16 %v774
    %v1427 = vunpack.c.l.b16 %v775
    %v1428 = vunpack.c.h.b16 %v775
    %v1429 = vunpack.c.l.b16 %v776
    %v1430 = vunpack.c.h.b16 %v776
    %v1431 = vunpack.c.l.b16 %v777
    %v1432 = vunpack.c.h.b16 %v777
    %v1433 = vunpack.c.l.b16 %v778
    %v1434 = vunpack.c.h.b16 %v778
    %v1435 = vunpack.c.l.b16 %v779
    %v1436 = vunpack.c.h.b16 %v779
    %v1437 = vunpack.c.l.b16 %v780
    %v1438 = vunpack.c.h.b16 %v780
    %v1439 = vunpack.c.l.b16 %v781
    %v1440 = vunpack.c.h.b16 %v781
    %v1441 = vunpack.c.l.b16 %v782
    %v1442 = vunpack.c.h.b16 %v782
    %v1443 = vunpack.c.l.b16 %v783
    %v1444 = vunpack.c.h.b16 %v783
    %v1445 = vunpack.c.l.b16 %v784
    %v1446 = vunpack.c.h.b16 %v784
    %v1447 = vunpack.c.l.b16 %v785
    %v1448 = vunpack.c.h.b16 %v785
    %v1449 = vunpack.c.l.b16 %v786
    %v1450 = vunpack.c.h.b16 %v786
    %v1451 = vunpack.c.l.b16 %v787
    %v1452 = vunpack.c.h.b16 %v787
    %v1453 = vunpack.c.l.b16 %v788
    %v1454 = vunpack.c.h.b16 %v788
    %v1455 = vunpack.c.l.b16 %v789
    %v1456 = vunpack.c.h.b16 %v789
    %v1457 = vunpack.c.l.b16 %v790
    %v1458 = vunpack.c.h.b16 %v790
    %v1459 = vunpack.c.l.b16 %v791
    %v1460 = vunpack.c.h.b16 %v791
    %v1461 = vunpack.c.l.b16 %v792
    %v1462 = vunpack.c.h.b16 %v792
    %v1463 = vunpack.c.l.b16 %v793
    %v1464 = vunpack.c.h.b16 %v793
    %v1465 = vunpack.c.l.b16 %v794
    %v1466 = vunpack.c.h.b16 %v794
    %v1467 = vunpack.c.l.b16 %v795
    %v1468 = vunpack.c.h.b16 %v795
    %v1469 = vunpack.c.l.b16 %v796
    %v1470 = vunpack.c.h.b16 %v796
    %v1471 = vunpack.c.l.b16 %v797
    %v1472 = vunpack.c.h.b16 %v797
    %v1473 = vunpack.c.l.b16 %v798
    %v1474 = vunpack.c.h.b16 %v798
    %v1475 = vunpack.c.l.b16 %v799
    %v1476 = vunpack.c.h.b16 %v799
    %v1477 = vunpack.c.l.b16 %v800
    %v1478 = vunpack.c.h.b16 %v800
    %v1479 = vunpack.c.l.b16 %v801
    %v1480 = vunpack.c.h.b16 %v801
    %v1481 = vunpack.c.l.b16 %v802
    %v1482 = vunpack.c.h.b16 %v802
    %v1483 = vunpack.c.l.b16 %v803
    %v1484 = vunpack.c.h.b16 %v803
    %v1485 = vunpack.c.l.b16 %v804
    %v1486 = vunpack.c.h.b16 %v804
    %v1487 = vunpack.c.l.b16 %v805
    %v1488 = vunpack.c.h.b16 %v805
    %v1489 = vunpack.c.l.b16 %v806
    %v1490 = vunpack.c.h.b16 %v806
    %v1491 = vunpack.c.l.b16 %v807
    %v1492 = vunpack.c.h.b16 %v807
    %v1493 = vunpack.c.l.b16 %v808
    %v1494 = vunpack.c.h.b16 %v808
    %v1495 = vunpack.c.l.b16 %v809
    %v1496 = vunpack.c.h.b16 %v809
    %v1497 = vunpack.c.l.b16 %v810
    %v1498 = vunpack.c.h.b16 %v810
    %v1499 = vunpack.c.l.b16 %v811
    %v1500 = vunpack.c.h.b16 %v811
    %v1501 = vunpack.c.l.b16 %v812
    %v1502 = vunpack.c.h.b16 %v812
    %v1503 = vunpack.c.l.b16 %v813
    %v1504 = vunpack.c.h.b16 %v813
    %v1505 = vunpack.c.l.b16 %v814
    %v1506 = vunpack.c.h.b16 %v814
    %v1507 = vunpack.c.l.b16 %v815
    %v1508 = vunpack.c.h.b16 %v815
    %v1509 = vunpack.c.l.b16 %v816
    %v1510 = vunpack.c.h.b16 %v816
    %v1511 = vunpack.c.l.b16 %v817
    %v1512 = vunpack.c.h.b16 %v817
    %v1513 = vunpack.c.l.b16 %v818
    %v1514 = vunpack.c.h.b16 %v818
    %v1515 = vunpack.c.l.b16 %v819
    %v1516 = vunpack.c.h.b16 %v819
    %v1517 = vunpack.c.l.b16 %v820
    %v1518 = vunpack.c.h.b16 %v820
    %v1519 = vunpack.c.l.b16 %v821
    %v1520 = vunpack.c.h.b16 %v821
    %v1521 = vunpack.c.l.b16 %v822
    %v1522 = vunpack.c.h.b16 %v822
    %v1523 = vunpack.c.l.b16 %v823
    %v1524 = vunpack.c.h.b16 %v823
    %v1525 = vunpack.c.l.b16 %v824
    %v1526 = vunpack.c.h.b16 %v824
    %v1527 = vunpack.c.l.b16 %v825
    %v1528 = vunpack.c.h.b16 %v825
    %v1529 = vunpack.c.l.b16 %v826
    %v1530 = vunpack.c.h.b16 %v826
    %v1531 = vunpack.c.l.b16 %v827
    %v1532 = vunpack.c.h.b16 %v827
    %v1533 = vunpack.c.l.b16 %v828
    %v1534 = vunpack.c.h.b16 %v828
    %v1535 = vunpack.c.l.b16 %v829
    %v1536 = vunpack.c.h.b16 %v829
    %v1537 = vunpack.c.l.b16 %v830
    %v1538 = vunpack.c.h.b16 %v830
    %v1539 = vunpack.c.l.b16 %v831
    %v1540 = vunpack.c.h.b16 %v831
    %v1541 = vunpack.c.l.b16 %v832
    %v1542 = vunpack.c.h.b16 %v832
    %v1543 = vunpack.c.l.b16 %v833
    %v1544 = vunpack.c.h.b16 %v833
    %v1545 = vunpack.c.l.b16 %v834
    %v1546 = vunpack.c.h.b16 %v834
    %v1547 = vunpack.c.l.b16 %v835
    %v1548 = vunpack.c.h.b16 %v835
    %v1549 = vunpack.c.l.b16 %v836
    %v1550 = vunpack.c.h.b16 %v836
    %v1551 = vunpack.c.l.b16 %v837
    %v1552 = vunpack.c.h.b16 %v837
    %v1553 = vunpack.c.l.b16 %v838
    %v1554 = vunpack.c.h.b16 %v838
    %v1555 = vunpack.c.l.b16 %v839
    %v1556 = vunpack.c.h.b16 %v839
    %v1557 = vunpack.c.l.b16 %v840
    %v1558 = vunpack.c.h.b16 %v840
    %v1559 = vunpack.c.l.b16 %v841
    %v1560 = vunpack.c.h.b16 %v841
    %v1561 = vunpack.c.l.b16 %v842
    %v1562 = vunpack.c.h.b16 %v842
    %v1563 = vunpack.c.l.b16 %v843
    %v1564 = vunpack.c.h.b16 %v843
    %v1565 = vunpack.c.l.b16 %v844
    %v1566 = vunpack.c.h.b16 %v844
    %v1567 = vunpack.c.l.b16 %v845
    %v1568 = vunpack.c.h.b16 %v845
    %v1569 = vunpack.c.l.b16 %v846
    %v1570 = vunpack.c.h.b16 %v846
    %v1571 = vunpack.c.l.b16 %v847
    %v1572 = vunpack.c.h.b16 %v847
    %v1573 = vunpack.c.l.b16 %v848
    %v1574 = vunpack.c.h.b16 %v848
    %v1575 = vunpack.c.l.b16 %v849
    %v1576 = vunpack.c.h.b16 %v849
    %v1577 = vunpack.c.l.b16 %v850
    %v1578 = vunpack.c.h.b16 %v850
    %v1579 = vunpack.c.l.b16 %v851
    %v1580 = vunpack.c.h.b16 %v851
    %v1581 = vunpack.c.l.b16 %v852
    %v1582 = vunpack.c.h.b16 %v852
    %v1583 = vunpack.c.l.b16 %v853
    %v1584 = vunpack.c.h.b16 %v853
    %v1585 = vunpack.c.l.b16 %v854
    %v1586 = vunpack.c.h.b16 %v854
    %v1587 = vunpack.c.l.b16 %v855
    %v1588 = vunpack.c.h.b16 %v855
    %v1589 = vunpack.c.l.b16 %v856
    %v1590 = vunpack.c.h.b16 %v856
    %v1591 = vunpack.c.l.b16 %v857
    %v1592 = vunpack.c.h.b16 %v857
    %v1593 = vunpack.c.l.b16 %v858
    %v1594 = vunpack.c.h.b16 %v858
    %v1595 = vunpack.c.l.b16 %v859
    %v1596 = vunpack.c.h.b16 %v859
    %v1597 = vunpack.c.l.b16 %v860
    %v1598 = vunpack.c.h.b16 %v860
    %v1599 = vunpack.c.l.b16 %v861
    %v1600 = vunpack.c.h.b16 %v861
    %v1601 = vunpack.c.l.b16 %v862
    %v1602 = vunpack.c.h.b16 %v862
    %v1603 = vunpack.c.l.b16 %v863
    %v1604 = vunpack.c.h.b16 %v863
    %v1605 = vunpack.c.l.b16 %v864
    %v1606 = vunpack.c.h.b16 %v864
    %v1607 = vunpack.c.l.b16 %v865
    %v1608 = vunpack.c.h.b16 %v865
    %v1609 = vunpack.c.l.b16 %v866
    %v1610 = vunpack.c.h.b16 %v866
    %v1611 = vunpack.c.l.b16 %v867
    %v1612 = vunpack.c.h.b16 %v867
    %v1613 = vunpack.c.l.b16 %v868
    %v1614 = vunpack.c.h.b16 %v868
    %v1615 = vunpack.c.l.b16 %v869
    %v1616 = vunpack.c.h.b16 %v869
    %v1617 = vunpack.c.l.b16 %v870
    %v1618 = vunpack.c.h.b16 %v870
    %v1619 = vunpack.c.l.b16 %v871
    %v1620 = vunpack.c.h.b16 %v871
    %v1621 = vunpack.c.l.b16 %v872
    %v1622 = vunpack.c.h.b16 %v872
    %v1623 = vunpack.c.l.b16 %v873
    %v1624 = vunpack.c.h.b16 %v873
    %v1625 = vunpack.c.l.b16 %v874
    %v1626 = vunpack.c.h.b16 %v874
    %v1627 = vunpack.c.l.b16 %v875
    %v1628 = vunpack.c.h.b16 %v875
    %v1629 = vunpack.c.l.b16 %v876
    %v1630 = vunpack.c.h.b16 %v876
    %v1631 = vunpack.c.l.b16 %v877
    %v1632 = vunpack.c.h.b16 %v877
    %v1633 = vunpack.c.l.b16 %v878
    %v1634 = vunpack.c.h.b16 %v878
    %v1635 = vunpack.c.l.b16 %v879
    %v1636 = vunpack.c.h.b16 %v879
    %v1637 = vunpack.c.l.b16 %v880
    %v1638 = vunpack.c.h.b16 %v880
    %v1639 = vunpack.c.l.b16 %v881
    %v1640 = vunpack.c.h.b16 %v881
    %v1641 = vunpack.c.l.b16 %v882
    %v1642 = vunpack.c.h.b16 %v882
    %v1643 = vunpack.c.l.b16 %v883
    %v1644 = vunpack.c.h.b16 %v883
    %v1645 = vunpack.c.l.b16 %v884
    %v1646 = vunpack.c.h.b16 %v884
    %v1647 = vunpack.c.l.b16 %v885
    %v1648 = vunpack.c.h.b16 %v885
    %v1649 = vunpack.c.l.b16 %v886
    %v1650 = vunpack.c.h.b16 %v886
    %v1651 = vunpack.c.l.b16 %v887
    %v1652 = vunpack.c.h.b16 %v887
    %v1653 = vunpack.c.l.b16 %v888
    %v1654 = vunpack.c.h.b16 %v888
    %v1655 = vunpack.c.l.b16 %v889
    %v1656 = vunpack.c.h.b16 %v889
    %v1657 = vunpack.c.l.b16 %v890
    %v1658 = vunpack.c.h.b16 %v890
    %v1659 = vunpack.c.l.b16 %v891
    %v1660 = vunpack.c.h.b16 %v891
    %v1661 = vunpack.c.l.b16 %v892
    %v1662 = vunpack.c.h.b16 %v892
    %v1663 = vunpack.c.l.b16 %v893
    %v1664 = vunpack.c.h.b16 %v893
    %v1665 = vunpack.c.l.b16 %v894
    %v1666 = vunpack.c.h.b16 %v894
    %v1667 = vunpack.c.l.b16 %v895
    %v1668 = vunpack.c.h.b16 %v895
    %v1669 = vunpack.c.l.b16 %v896
    %v1670 = vunpack.c.h.b16 %v896
    %v1671 = vunpack.c.l.b16 %v897
    %v1672 = vunpack.c.h.b16 %v897
    %v1673 = vunpack.c.l.b16 %v898
    %v1674 = vunpack.c.h.b16 %v898
    %v1675 = vunpack.c.l.b16 %v899
    %v1676 = vunpack.c.h.b16 %v899
    %v1677 = vunpack.c.l.b16 %v900
    %v1678 = vunpack.c.h.b16 %v900
    %v1679 = vunpack.c.l.b16 %v901
    %v1680 = vunpack.c.h.b16 %v901
    %v1681 = vunpack.c.l.b16 %v902
    %v1682 = vunpack.c.h.b16 %v902
    %v1683 = vunpack.c.l.b16 %v903
    %v1684 = vunpack.c.h.b16 %v903
    %v1685 = vunpack.c.l.b16 %v904
    %v1686 = vunpack.c.h.b16 %v904
    %v1687 = vunpack.c.l.b16 %v905
    %v1688 = vunpack.c.h.b16 %v905
    %v1689 = vunpack.c.l.b16 %v906
    %v1690 = vunpack.c.h.b16 %v906
    %v1691 = vunpack.c.l.b16 %v907
    %v1692 = vunpack.c.h.b16 %v907
    %v1693 = vunpack.c.l.b16 %v908
    %v1694 = vunpack.c.h.b16 %v908
    %v1695 = vunpack.c.l.b16 %v909
    %v1696 = vunpack.c.h.b16 %v909
    %v1697 = vunpack.c.l.b16 %v910
    %v1698 = vunpack.c.h.b16 %v910
    %v1699 = vunpack.c.l.b16 %v911
    %v1700 = vunpack.c.h.b16 %v911
    %v1701 = vunpack.c.l.b16 %v912
    %v1702 = vunpack.c.h.b16 %v912
    %v1703 = vpack.c.b16 %v1195, %v1191
    %v1704 = vpack.c.b16 %v1196, %v1192
    %v1705 = vpack.c.b16 %v1197, %v1193
    %v1706 = vpack.c.b16 %v1198, %v1194
    %v1707 = vpack.c.b16 %v1203, %v1199
    %v1708 = vpack.c.b16 %v1204, %v1200
    %v1709 = vpack.c.b16 %v1205, %v1201
    %v1710 = vpack.c.b16 %v1206, %v1202
    %v1711 = vpack.c.b16 %v1211, %v1207
    %v1712 = vpack.c.b16 %v1212, %v1208
    %v1713 = vpack.c.b16 %v1213, %v1209
    %v1714 = vpack.c.b16 %v1214, %v1210
    %v1715 = vpack.c.b16 %v1219, %v1215
    %v1716 = vpack.c.b16 %v1220, %v1216
    %v1717 = vpack.c.b16 %v1221, %v1217
    %v1718 = vpack.c.b16 %v1222, %v1218
    %v1719 = vpack.c.b16 %v1227, %v1223
    %v1720 = vpack.c.b16 %v1228, %v1224
    %v1721 = vpack.c.b16 %v1229, %v1225
    %v1722 = vpack.c.b16 %v1230, %v1226
    %v1723 = vpack.c.b16 %v1235, %v1231
    %v1724 = vpack.c.b16 %v1236, %v1232
    %v1725 = vpack.c.b16 %v1237, %v1233
    %v1726 = vpack.c.b16 %v1238, %v1234
    %v1727 = vpack.c.b16 %v1243, %v1239
    %v1728 = vpack.c.b16 %v1244, %v1240
    %v1729 = vpack.c.b16 %v1245, %v1241
    %v1730 = vpack.c.b16 %v1246, %v1242
    %v1731 = vpack.c.b16 %v1251, %v1247
    %v1732 = vpack.c.b16 %v1252, %v1248
    %v1733 = vpack.c.b16 %v1253, %v1249
    %v1734 = vpack.c.b16 %v1254, %v1250
    %v1735 = vpack.c.b16 %v1259, %v1255
    %v1736 = vpack.c.b16 %v1260, %v1256
    %v1737 = vpack.c.b16 %v1261, %v1257
    %v1738 = vpack.c.b16 %v1262, %v1258
    %v1739 = vpack.c.b16 %v1267, %v1263
    %v1740 = vpack.c.b16 %v1268, %v1264
    %v1741 = vpack.c.b16 %v1269, %v1265
    %v1742 = vpack.c.b16 %v1270, %v1266
    %v1743 = vpack.c.b16 %v1275, %v1271
    %v1744 = vpack.c.b16 %v1276, %v1272
    %v1745 = vpack.c.b16 %v1277, %v1273
    %v1746 = vpack.c.b16 %v1278, %v1274
    %v1747 = vpack.c.b16 %v1283, %v1279
    %v1748 = vpack.c.b16 %v1284, %v1280
    %v1749 = vpack.c.b16 %v1285, %v1281
    %v1750 = vpack.c.b16 %v1286, %v1282
    %v1751 = vpack.c.b16 %v1291, %v1287
    %v1752 = vpack.c.b16 %v1292, %v1288
    %v1753 = vpack.c.b16 %v1293, %v1289
    %v1754 = vpack.c.b16 %v1294, %v1290
    %v1755 = vpack.c.b16 %v1299, %v1295
    %v1756 = vpack.c.b16 %v1300, %v1296
    %v1757 = vpack.c.b16 %v1301, %v1297
    %v1758 = vpack.c.b16 %v1302, %v1298
    %v1759 = vpack.c.b16 %v1307, %v1303
    %v1760 = vpack.c.b16 %v1308, %v1304
    %v1761 = vpack.c.b16 %v1309, %v1305
    %v1762 = vpack.c.b16 %v1310, %v1306
    %v1763 = vpack.c.b16 %v1315, %v1311
    %v1764 = vpack.c.b16 %v1316, %v1312
    %v1765 = vpack.c.b16 %v1317, %v1313
    %v1766 = vpack.c.b16 %v1318, %v1314
    %v1767 = vpack.c.b16 %v1323, %v1319
    %v1768 = vpack.c.b16 %v1324, %v1320
    %v1769 = vpack.c.b16 %v1325, %v1321
    %v1770 = vpack.c.b16 %v1326, %v1322
    %v1771 = vpack.c.b16 %v1331, %v1327
    %v1772 = vpack.c.b16 %v1332, %v1328
    %v1773 = vpack.c.b16 %v1333, %v1329
    %v1774 = vpack.c.b16 %v1334, %v1330
    %v1775 = vpack.c.b16 %v1339, %v1335
    %v1776 = vpack.c.b16 %v1340, %v1336
    %v1777 = vpack.c.b16 %v1341, %v1337
    %v1778 = vpack.c.b16 %v1342, %v1338
    %v1779 = vpack.c.b16 %v1347, %v1343
    %v1780 = vpack.c.b16 %v1348, %v1344
    %v1781 = vpack.c.b16 %v1349, %v1345
    %v1782 = vpack.c.b16 %v1350, %v1346
    %v1783 = vpack.c.b16 %v1355, %v1351
    %v1784 = vpack.c.b16 %v1356, %v1352
    %v1785 = vpack.c.b16 %v1357, %v1353
    %v1786 = vpack.c.b16 %v1358, %v1354
    %v1787 = vpack.c.b16 %v1363, %v1359
    %v1788 = vpack.c.b16 %v1364, %v1360
    %v1789 = vpack.c.b16 %v1365, %v1361
    %v1790 = vpack.c.b16 %v1366, %v1362
    %v1791 = vpack.c.b16 %v1371, %v1367
    %v1792 = vpack.c.b16 %v1372, %v1368
    %v1793 = vpack.c.b16 %v1373, %v1369
    %v1794 = vpack.c.b16 %v1374, %v1370
    %v1795 = vpack.c.b16 %v1379, %v1375
    %v1796 = vpack.c.b16 %v1380, %v1376
    %v1797 = vpack.c.b16 %v1381, %v1377
    %v1798 = vpack.c.b16 %v1382, %v1378
    %v1799 = vpack.c.b16 %v1387, %v1383
    %v1800 = vpack.c.b16 %v1388, %v1384
    %v1801 = vpack.c.b16 %v1389, %v1385
    %v1802 = vpack.c.b16 %v1390, %v1386
    %v1803 = vpack.c.b16 %v1395, %v1391
    %v1804 = vpack.c.b16 %v1396, %v1392
    %v1805 = vpack.c.b16 %v1397, %v1393
    %v1806 = vpack.c.b16 %v1398, %v1394
    %v1807 = vpack.c.b16 %v1403, %v1399
    %v1808 = vpack.c.b16 %v1404, %v1400
    %v1809 = vpack.c.b16 %v1405, %v1401
    %v1810 = vpack.c.b16 %v1406, %v1402
    %v1811 = vpack.c.b16 %v1411, %v1407
    %v1812 = vpack.c.b16 %v1412, %v1408
    %v1813 = vpack.c.b16 %v1413, %v1409
    %v1814 = vpack.c.b16 %v1414, %v1410
    %v1815 = vpack.c.b16 %v1419, %v1415
    %v1816 = vpack.c.b16 %v1420, %v1416
    %v1817 = vpack.c.b16 %v1421, %v1417
    %v1818 = vpack.c.b16 %v1422, %v1418
    %v1819 = vpack.c.b16 %v1427, %v1423
    %v1820 = vpack.c.b16 %v1428, %v1424
    %v1821 = vpack.c.b16 %v1429, %v1425
    %v1822 = vpack.c.b16 %v1430, %v1426
    %v1823 = vpack.c.b16 %v1435, %v1431
    %v1824 = vpack.c.b16 %v1436, %v1432
    %v1825 = vpack.c.b16 %v1437, %v1433
    %v1826 = vpack.c.b16 %v1438, %v1434
    %v1827 = vpack.c.b16 %v1443, %v1439
    %v1828 = vpack.c.b16 %v1444, %v1440
    %v1829 = vpack.c.b16 %v1445, %v1441
    %v1830 = vpack.c.b16 %v1446, %v1442
    %v1831 = vpack.c.b16 %v1451, %v1447
    %v1832 = vpack.c.b16 %v1452, %v1448
    %v1833 = vpack.c.b16 %v1453, %v1449
    %v1834 = vpack.c.b16 %v1454, %v1450
    %v1835 = vpack.c.b16 %v1459, %v1455
    %v1836 = vpack.c.b16 %v1460, %v1456
    %v1837 = vpack.c.b16 %v1461, %v1457
    %v1838 = vpack.c.b16 %v1462, %v1458
    %v1839 = vpack.c.b16 %v1467, %v1463
    %v1840 = vpack.c.b16 %v1468, %v1464
    %v1841 = vpack.c.b16 %v1469, %v1465
    %v1842 = vpack.c.b16 %v1470, %v1466
    %v1843 = vpack.c.b16 %v1475, %v1471
    %v1844 = vpack.c.b16 %v1476, %v1472
    %v1845 = vpack.c.b16 %v1477, %v1473
    %v1846 = vpack.c.b16 %v1478, %v1474
    %v1847 = vpack.c.b16 %v1483, %v1479
    %v1848 = vpack.c.b16 %v1484, %v1480
    %v1849 = vpack.c.b16 %v1485, %v1481
    %v1850 = vpack.c.b16 %v1486, %v1482
    %v1851 = vpack.c.b16 %v1491, %v1487
    %v1852 = vpack.c.b16 %v1492, %v1488
    %v1853 = vpack.c.b16 %v1493, %v1489
    %v1854 = vpack.c.b16 %v1494, %v1490
    %v1855 = vpack.c.b16 %v1499, %v1495
    %v1856 = vpack.c.b16 %v1500, %v1496
    %v1857 = vpack.c.b16 %v1501, %v1497
    %v1858 = vpack.c.b16 %v1502, %v1498
    %v1859 = vpack.c.b16 %v1507, %v1503
    %v1860 = vpack.c.b16 %v1508, %v1504
    %v1861 = vpack.c.b16 %v1509, %v1505
    %v1862 = vpack.c.b16 %v1510, %v1506
    %v1863 = vpack.c.b16 %v1515, %v1511
    %v1864 = vpack.c.b16 %v1516, %v1512
    %v1865 = vpack.c.b16 %v1517, %v1513
    %v1866 = vpack.c.b16 %v1518, %v1514
    %v1867 = vpack.c.b16 %v1523, %v1519
    %v1868 = vpack.c.b16 %v1524, %v1520
    %v1869 = vpack.c.b16 %v1525, %v1521
    %v1870 = vpack.c.b16 %v1526, %v1522
    %v1871 = vpack.c.b16 %v1531, %v1527
    %v1872 = vpack.c.b16 %v1532, %v1528
    %v1873 = vpack.c.b16 %v1533, %v1529
    %v1874 = vpack.c.b16 %v1534, %v1530
    %v1875 = vpack.c.b16 %v1539, %v1535
    %v1876 = vpack.c.b16 %v1540, %v1536
    %v1877 = vpack.c.b16 %v1541, %v1537
    %v1878 = vpack.c.b16 %v1542, %v1538
    %v1879 = vpack.c.b16 %v1547, %v1543
    %v1880 = vpack.c.b16 %v1548, %v1544
    %v1881 = vpack.c.b16 %v1549, %v1545
    %v1882 = vpack.c.b16 %v1550, %v1546
    %v1883 = vpack.c.b16 %v1555, %v1551
    %v1884 = vpack.c.b16 %v1556, %v1552
    %v1885 = vpack.c.b16 %v1557, %v1553
    %v1886 = vpack.c.b16 %v1558, %v1554
    %v1887 = vpack.c.b16 %v1563, %v1559
    %v1888 = vpack.c.b16 %v1564, %v1560
    %v1889 = vpack.c.b16 %v1565, %v1561
    %v1890 = vpack.c.b16 %v1566, %v1562
    %v1891 = vpack.c.b16 %v1571, %v1567
    %v1892 = vpack.c.b16 %v1572, %v1568
    %v1893 = vpack.c.b16 %v1573, %v1569
    %v1894 = vpack.c.b16 %v1574, %v1570
    %v1895 = vpack.c.b16 %v1579, %v1575
    %v1896 = vpack.c.b16 %v1580, %v1576
    %v1897 = vpack.c.b16 %v1581, %v1577
    %v1898 = vpack.c.b16 %v1582, %v1578
    %v1899 = vpack.c.b16 %v1587, %v1583
    %v1900 = vpack.c.b16 %v1588, %v1584
    %v1901 = vpack.c.b16 %v1589, %v1585
    %v1902 = vpack.c.b16 %v1590, %v1586
    %v1903 = vpack.c.b16 %v1595, %v1591
    %v1904 = vpack.c.b16 %v1596, %v1592
    %v1905 = vpack.c.b16 %v1597, %v1593
    %v1906 = vpack.c.b16 %v1598, %v1594
    %v1907 = vpack.c.b16 %v1603, %v1599
    %v1908 = vpack.c.b16 %v1604, %v1600
    %v1909 = vpack.c.b16 %v1605, %v1601
    %v1910 = vpack.c.b16 %v1606, %v1602
    %v1911 = vpack.c.b16 %v1611, %v1607
    %v1912 = vpack.c.b16 %v1612, %v1608
    %v1913 = vpack.c.b16 %v1613, %v1609
    %v1914 = vpack.c.b16 %v1614, %v1610
    %v1915 = vpack.c.b16 %v1619, %v1615
    %v1916 = vpack.c.b16 %v1620, %v1616
    %v1917 = vpack.c.b16 %v1621, %v1617
    %v1918 = vpack.c.b16 %v1622, %v1618
    %v1919 = vpack.c.b16 %v1627, %v1623
    %v1920 = vpack.c.b16 %v1628, %v1624
    %v1921 = vpack.c.b16 %v1629, %v1625
    %v1922 = vpack.c.b16 %v1630, %v1626
    %v1923 = vpack.c.b16 %v1635, %v1631
    %v1924 = vpack.c.b16 %v1636, %v1632
    %v1925 = vpack.c.b16 %v1637, %v1633
    %v1926 = vpack.c.b16 %v1638, %v1634
    %v1927 = vpack.c.b16 %v1643, %v1639
    %v1928 = vpack.c.b16 %v1644, %v1640
    %v1929 = vpack.c.b16 %v1645, %v1641
    %v1930 = vpack.c.b16 %v1646, %v1642
    %v1931 = vpack.c.b16 %v1651, %v1647
    %v1932 = vpack.c.b16 %v1652, %v1648
    %v1933 = vpack.c.b16 %v1653, %v1649
    %v1934 = vpack.c.b16 %v1654, %v1650
    %v1935 = vpack.c.b16 %v1659, %v1655
    %v1936 = vpack.c.b16 %v1660, %v1656
    %v1937 = vpack.c.b16 %v1661, %v1657
    %v1938 = vpack.c.b16 %v1662, %v1658
    %v1939 = vpack.c.b16 %v1667, %v1663
    %v1940 = vpack.c.b16 %v1668, %v1664
    %v1941 = vpack.c.b16 %v1669, %v1665
    %v1942 = vpack.c.b16 %v1670, %v1666
    %v1943 = vpack.c.b16 %v1675, %v1671
    %v1944 = vpack.c.b16 %v1676, %v1672
    %v1945 = vpack.c.b16 %v1677, %v1673
    %v1946 = vpack.c.b16 %v1678, %v1674
    %v1947 = vpack.c.b16 %v1683, %v1679
    %v1948 = vpack.c.b16 %v1684, %v1680
    %v1949 = vpack.c.b16 %v1685, %v1681
    %v1950 = vpack.c.b16 %v1686, %v1682
    %v1951 = vpack.c.b16 %v1691, %v1687
    %v1952 = vpack.c.b16 %v1692, %v1688
    %v1953 = vpack.c.b16 %v1693, %v1689
    %v1954 = vpack.c.b16 %v1694, %v1690
    %v1955 = vpack.c.b16 %v1699, %v1695
    %v1956 = vpack.c.b16 %v1700, %v1696
    %v1957 = vpack.c.b16 %v1701, %v1697
    %v1958 = vpack.c.b16 %v1702, %v1698
    %2215 = vmatprep.subr.bf16.mxu0 %v1732
    %2216 = vmatpush1.bf16.msra.mxu0 %v1731
    %2217 = vmatprep.subr.bf16.mxu0 %v1728
    %2218 = vmatpush1.bf16.msra.mxu0 %v1727
    %2219 = vmatprep.subr.bf16.mxu0 %v1724
    %2220 = vmatpush1.bf16.msra.mxu0 %v1723
    %2221 = vmatprep.subr.bf16.mxu0 %v1720
    %2222 = vmatpush1.bf16.msra.mxu0 %v1719
    %2223 = vmatprep.subr.bf16.mxu0 %v1716
    %2224 = vmatpush1.bf16.msra.mxu0 %v1715
    %2225 = vmatprep.subr.bf16.mxu0 %v1712
    %2226 = vmatpush1.bf16.msra.mxu0 %v1711
    %2227 = vmatprep.subr.bf16.mxu0 %v1708
    %2228 = vmatpush1.bf16.msra.mxu0 %v1707
    %2229 = vmatprep.subr.bf16.mxu0 %v1704
    %2230 = vmatpush1.bf16.msra.mxu0 %v1703
    %2231 = vmatprep.subr.bf16.mxu0 %v1764
    %2232 = vmatpush2.bf16.msra.mxu0 %v1763
    %2233 = vmatprep.subr.bf16.mxu0 %v1760
    %2234 = vmatpush2.bf16.msra.mxu0 %v1759
    %2235 = vmatprep.subr.bf16.mxu0 %v1756
    %2236 = vmatpush2.bf16.msra.mxu0 %v1755
    %2237 = vmatprep.subr.bf16.mxu0 %v1752
    %2238 = vmatpush2.bf16.msra.mxu0 %v1751
    %2239 = vmatprep.subr.bf16.mxu0 %v1748
    %2240 = vmatpush2.bf16.msra.mxu0 %v1747
    %2241 = vmatprep.subr.bf16.mxu0 %v1744
    %2242 = vmatpush2.bf16.msra.mxu0 %v1743
    %2243 = vmatprep.subr.bf16.mxu0 %v1740
    %2244 = vmatpush2.bf16.msra.mxu0 %v1739
    %2245 = vmatprep.subr.bf16.mxu0 %v1736
    %2246 = vmatpush2.bf16.msra.mxu0 %v1735
    %2247 = vmatprep.mubr.bf16.mxu0 %v650
    %2248 = vmatmul.mubr.bf16.gmra.mxu0 %v649
    %v2249 = vpop.f32.mrf.mxu0
    %v2250 = vadd.f32 %v918, %v2249
    %v2251 = vpop.f32.mrf.mxu0
    %v2252 = vadd.f32 %v922, %v2251
    %v2253 = vpop.f32.mrf.mxu0
    %v2254 = vpop.f32.mrf.mxu0
    %2255 = vdwg.mxu0
    %2256 = vmatprep.subr.bf16.mxu0 %v1796
    %2257 = vmatpush1.bf16.msra.mxu0 %v1795
    %2258 = vmatprep.subr.bf16.mxu0 %v1792
    %2259 = vmatpush1.bf16.msra.mxu0 %v1791
    %2260 = vmatprep.subr.bf16.mxu0 %v1788
    %2261 = vmatpush1.bf16.msra.mxu0 %v1787
    %2262 = vmatprep.subr.bf16.mxu0 %v1784
    %2263 = vmatpush1.bf16.msra.mxu0 %v1783
    %2264 = vmatprep.subr.bf16.mxu0 %v1780
    %2265 = vmatpush1.bf16.msra.mxu0 %v1779
    %2266 = vmatprep.subr.bf16.mxu0 %v1776
    %2267 = vmatpush1.bf16.msra.mxu0 %v1775
    %2268 = vmatprep.subr.bf16.mxu0 %v1772
    %2269 = vmatpush1.bf16.msra.mxu0 %v1771
    %2270 = vmatprep.subr.bf16.mxu0 %v1768
    %2271 = vmatpush1.bf16.msra.mxu0 %v1767
    %2272 = vmatprep.subr.bf16.mxu0 %v1828
    %2273 = vmatpush2.bf16.msra.mxu0 %v1827
    %2274 = vmatprep.subr.bf16.mxu0 %v1824
    %2275 = vmatpush2.bf16.msra.mxu0 %v1823
    %2276 = vmatprep.subr.bf16.mxu0 %v1820
    %2277 = vmatpush2.bf16.msra.mxu0 %v1819
    %2278 = vmatprep.subr.bf16.mxu0 %v1816
    %2279 = vmatpush2.bf16.msra.mxu0 %v1815
    %2280 = vmatprep.subr.bf16.mxu0 %v1812
    %2281 = vmatpush2.bf16.msra.mxu0 %v1811
    %2282 = vmatprep.subr.bf16.mxu0 %v1808
    %2283 = vmatpush2.bf16.msra.mxu0 %v1807
    %2284 = vmatprep.subr.bf16.mxu0 %v1804
    %2285 = vmatpush2.bf16.msra.mxu0 %v1803
    %2286 = vmatprep.subr.bf16.mxu0 %v1800
    %2287 = vmatpush2.bf16.msra.mxu0 %v1799
    %2288 = vmatprep.mubr.bf16.mxu0 %v652
    %2289 = vmatmul.mubr.bf16.gmra.mxu0 %v651
    %v2290 = vpop.f32.mrf.mxu0
    %v2291 = vadd.f32 %v2250, %v2290
    %v2292 = vpop.f32.mrf.mxu0
    %v2293 = vadd.f32 %v2252, %v2292
    %v2294 = vpop.f32.mrf.mxu0
    %v2295 = vpop.f32.mrf.mxu0
    %2296 = vdwg.mxu0
    %2297 = vmatprep.subr.bf16.mxu0 %v1860
    %2298 = vmatpush1.bf16.msra.mxu0 %v1859
    %2299 = vmatprep.subr.bf16.mxu0 %v1856
    %2300 = vmatpush1.bf16.msra.mxu0 %v1855
    %2301 = vmatprep.subr.bf16.mxu0 %v1852
    %2302 = vmatpush1.bf16.msra.mxu0 %v1851
    %2303 = vmatprep.subr.bf16.mxu0 %v1848
    %2304 = vmatpush1.bf16.msra.mxu0 %v1847
    %2305 = vmatprep.subr.bf16.mxu0 %v1844
    %2306 = vmatpush1.bf16.msra.mxu0 %v1843
    %2307 = vmatprep.subr.bf16.mxu0 %v1840
    %2308 = vmatpush1.bf16.msra.mxu0 %v1839
    %2309 = vmatprep.subr.bf16.mxu0 %v1836
    %2310 = vmatpush1.bf16.msra.mxu0 %v1835
    %2311 = vmatprep.subr.bf16.mxu0 %v1832
    %2312 = vmatpush1.bf16.msra.mxu0 %v1831
    %2313 = vmatprep.subr.bf16.mxu0 %v1892
    %2314 = vmatpush2.bf16.msra.mxu0 %v1891
    %2315 = vmatprep.subr.bf16.mxu0 %v1888
    %2316 = vmatpush2.bf16.msra.mxu0 %v1887
    %2317 = vmatprep.subr.bf16.mxu0 %v1884
    %2318 = vmatpush2.bf16.msra.mxu0 %v1883
    %2319 = vmatprep.subr.bf16.mxu0 %v1880
    %2320 = vmatpush2.bf16.msra.mxu0 %v1879
    %2321 = vmatprep.subr.bf16.mxu0 %v1876
    %2322 = vmatpush2.bf16.msra.mxu0 %v1875
    %2323 = vmatprep.subr.bf16.mxu0 %v1872
    %2324 = vmatpush2.bf16.msra.mxu0 %v1871
    %2325 = vmatprep.subr.bf16.mxu0 %v1868
    %2326 = vmatpush2.bf16.msra.mxu0 %v1867
    %2327 = vmatprep.subr.bf16.mxu0 %v1864
    %2328 = vmatpush2.bf16.msra.mxu0 %v1863
    %2329 = vmatprep.mubr.bf16.mxu0 %v654
    %2330 = vmatmul.mubr.bf16.gmra.mxu0 %v653
    %v2331 = vpop.f32.mrf.mxu0
    %v2332 = vadd.f32 %v2291, %v2331
    %v2333 = vpop.f32.mrf.mxu0
    %v2334 = vadd.f32 %v2293, %v2333
    %v2335 = vpop.f32.mrf.mxu0
    %v2336 = vpop.f32.mrf.mxu0
    %2337 = vdwg.mxu0
    %2338 = vmatprep.subr.bf16.mxu0 %v1924
    %2339 = vmatpush1.bf16.msra.mxu0 %v1923
    %2340 = vmatprep.subr.bf16.mxu0 %v1920
    %2341 = vmatpush1.bf16.msra.mxu0 %v1919
    %2342 = vmatprep.subr.bf16.mxu0 %v1916
    %2343 = vmatpush1.bf16.msra.mxu0 %v1915
    %2344 = vmatprep.subr.bf16.mxu0 %v1912
    %2345 = vmatpush1.bf16.msra.mxu0 %v1911
    %2346 = vmatprep.subr.bf16.mxu0 %v1908
    %2347 = vmatpush1.bf16.msra.mxu0 %v1907
    %2348 = vmatprep.subr.bf16.mxu0 %v1904
    %2349 = vmatpush1.bf16.msra.mxu0 %v1903
    %2350 = vmatprep.subr.bf16.mxu0 %v1900
    %2351 = vmatpush1.bf16.msra.mxu0 %v1899
    %2352 = vmatprep.subr.bf16.mxu0 %v1896
    %2353 = vmatpush1.bf16.msra.mxu0 %v1895
    %2354 = vmatprep.subr.bf16.mxu0 %v1956
    %2355 = vmatpush2.bf16.msra.mxu0 %v1955
    %2356 = vmatprep.subr.bf16.mxu0 %v1952
    %2357 = vmatpush2.bf16.msra.mxu0 %v1951
    %2358 = vmatprep.subr.bf16.mxu0 %v1948
    %2359 = vmatpush2.bf16.msra.mxu0 %v1947
    %2360 = vmatprep.subr.bf16.mxu0 %v1944
    %2361 = vmatpush2.bf16.msra.mxu0 %v1943
    %2362 = vmatprep.subr.bf16.mxu0 %v1940
    %2363 = vmatpush2.bf16.msra.mxu0 %v1939
    %2364 = vmatprep.subr.bf16.mxu0 %v1936
    %2365 = vmatpush2.bf16.msra.mxu0 %v1935
    %2366 = vmatprep.subr.bf16.mxu0 %v1932
    %2367 = vmatpush2.bf16.msra.mxu0 %v1931
    %2368 = vmatprep.subr.bf16.mxu0 %v1928
    %2369 = vmatpush2.bf16.msra.mxu0 %v1927
    %2370 = vmatprep.mubr.bf16.mxu0 %v656
    %2371 = vmatmul.mubr.bf16.gmra.mxu0 %v655
    %v2372 = vpop.f32.mrf.mxu0
    %v2373 = vadd.f32 %v2332, %v2372
    %v2374 = vpop.f32.mrf.mxu0
    %v2375 = vadd.f32 %v2334, %v2374
    %v2376 = vpop.f32.mrf.mxu0
    %v2377 = vpop.f32.mrf.mxu0
    %2378 = vdwg.mxu0
    %2379 = vmatprep.subr.bf16.mxu0 %v1734
    %2380 = vmatpush1.bf16.msra.mxu0 %v1733
    %2381 = vmatprep.subr.bf16.mxu0 %v1730
    %2382 = vmatpush1.bf16.msra.mxu0 %v1729
    %2383 = vmatprep.subr.bf16.mxu0 %v1726
    %2384 = vmatpush1.bf16.msra.mxu0 %v1725
    %2385 = vmatprep.subr.bf16.mxu0 %v1722
    %2386 = vmatpush1.bf16.msra.mxu0 %v1721
    %2387 = vmatprep.subr.bf16.mxu0 %v1718
    %2388 = vmatpush1.bf16.msra.mxu0 %v1717
    %2389 = vmatprep.subr.bf16.mxu0 %v1714
    %2390 = vmatpush1.bf16.msra.mxu0 %v1713
    %2391 = vmatprep.subr.bf16.mxu0 %v1710
    %2392 = vmatpush1.bf16.msra.mxu0 %v1709
    %2393 = vmatprep.subr.bf16.mxu0 %v1706
    %2394 = vmatpush1.bf16.msra.mxu0 %v1705
    %2395 = vmatprep.subr.bf16.mxu0 %v1766
    %2396 = vmatpush2.bf16.msra.mxu0 %v1765
    %2397 = vmatprep.subr.bf16.mxu0 %v1762
    %2398 = vmatpush2.bf16.msra.mxu0 %v1761
    %2399 = vmatprep.subr.bf16.mxu0 %v1758
    %2400 = vmatpush2.bf16.msra.mxu0 %v1757
    %2401 = vmatprep.subr.bf16.mxu0 %v1754
    %2402 = vmatpush2.bf16.msra.mxu0 %v1753
    %2403 = vmatprep.subr.bf16.mxu0 %v1750
    %2404 = vmatpush2.bf16.msra.mxu0 %v1749
    %2405 = vmatprep.subr.bf16.mxu0 %v1746
    %2406 = vmatpush2.bf16.msra.mxu0 %v1745
    %2407 = vmatprep.subr.bf16.mxu0 %v1742
    %2408 = vmatpush2.bf16.msra.mxu0 %v1741
    %2409 = vmatprep.subr.bf16.mxu0 %v1738
    %2410 = vmatpush2.bf16.msra.mxu0 %v1737
    %2411 = vmatprep.mubr.bf16.mxu0 %v650
    %2412 = vmatmul.mubr.bf16.gmra.mxu0 %v649
    %v2413 = vpop.f32.mrf.mxu0
    %v2414 = vadd.f32 %v926, %v2413
    %v2415 = vpop.f32.mrf.mxu0
    %v2416 = vadd.f32 %v930, %v2415
    %v2417 = vpop.f32.mrf.mxu0
    %v2418 = vpop.f32.mrf.mxu0
    %2419 = vdwg.mxu0
    %2420 = vmatprep.subr.bf16.mxu0 %v1798
    %2421 = vmatpush1.bf16.msra.mxu0 %v1797
    %2422 = vmatprep.subr.bf16.mxu0 %v1794
    %2423 = vmatpush1.bf16.msra.mxu0 %v1793
    %2424 = vmatprep.subr.bf16.mxu0 %v1790
    %2425 = vmatpush1.bf16.msra.mxu0 %v1789
    %2426 = vmatprep.subr.bf16.mxu0 %v1786
    %2427 = vmatpush1.bf16.msra.mxu0 %v1785
    %2428 = vmatprep.subr.bf16.mxu0 %v1782
    %2429 = vmatpush1.bf16.msra.mxu0 %v1781
    %2430 = vmatprep.subr.bf16.mxu0 %v1778
    %2431 = vmatpush1.bf16.msra.mxu0 %v1777
    %2432 = vmatprep.subr.bf16.mxu0 %v1774
    %2433 = vmatpush1.bf16.msra.mxu0 %v1773
    %2434 = vmatprep.subr.bf16.mxu0 %v1770
    %2435 = vmatpush1.bf16.msra.mxu0 %v1769
    %2436 = vmatprep.subr.bf16.mxu0 %v1830
    %2437 = vmatpush2.bf16.msra.mxu0 %v1829
    %2438 = vmatprep.subr.bf16.mxu0 %v1826
    %2439 = vmatpush2.bf16.msra.mxu0 %v1825
    %2440 = vmatprep.subr.bf16.mxu0 %v1822
    %2441 = vmatpush2.bf16.msra.mxu0 %v1821
    %2442 = vmatprep.subr.bf16.mxu0 %v1818
    %2443 = vmatpush2.bf16.msra.mxu0 %v1817
    %2444 = vmatprep.subr.bf16.mxu0 %v1814
    %2445 = vmatpush2.bf16.msra.mxu0 %v1813
    %2446 = vmatprep.subr.bf16.mxu0 %v1810
    %2447 = vmatpush2.bf16.msra.mxu0 %v1809
    %2448 = vmatprep.subr.bf16.mxu0 %v1806
    %2449 = vmatpush2.bf16.msra.mxu0 %v1805
    %2450 = vmatprep.subr.bf16.mxu0 %v1802
    %2451 = vmatpush2.bf16.msra.mxu0 %v1801
    %2452 = vmatprep.mubr.bf16.mxu0 %v652
    %2453 = vmatmul.mubr.bf16.gmra.mxu0 %v651
    %v2454 = vpop.f32.mrf.mxu0
    %v2455 = vadd.f32 %v2414, %v2454
    %v2456 = vpop.f32.mrf.mxu0
    %v2457 = vadd.f32 %v2416, %v2456
    %v2458 = vpop.f32.mrf.mxu0
    %v2459 = vpop.f32.mrf.mxu0
    %2460 = vdwg.mxu0
    %2461 = vmatprep.subr.bf16.mxu0 %v1862
    %2462 = vmatpush1.bf16.msra.mxu0 %v1861
    %2463 = vmatprep.subr.bf16.mxu0 %v1858
    %2464 = vmatpush1.bf16.msra.mxu0 %v1857
    %2465 = vmatprep.subr.bf16.mxu0 %v1854
    %2466 = vmatpush1.bf16.msra.mxu0 %v1853
    %2467 = vmatprep.subr.bf16.mxu0 %v1850
    %2468 = vmatpush1.bf16.msra.mxu0 %v1849
    %2469 = vmatprep.subr.bf16.mxu0 %v1846
    %2470 = vmatpush1.bf16.msra.mxu0 %v1845
    %2471 = vmatprep.subr.bf16.mxu0 %v1842
    %2472 = vmatpush1.bf16.msra.mxu0 %v1841
    %2473 = vmatprep.subr.bf16.mxu0 %v1838
    %2474 = vmatpush1.bf16.msra.mxu0 %v1837
    %2475 = vmatprep.subr.bf16.mxu0 %v1834
    %2476 = vmatpush1.bf16.msra.mxu0 %v1833
    %2477 = vmatprep.subr.bf16.mxu0 %v1894
    %2478 = vmatpush2.bf16.msra.mxu0 %v1893
    %2479 = vmatprep.subr.bf16.mxu0 %v1890
    %2480 = vmatpush2.bf16.msra.mxu0 %v1889
    %2481 = vmatprep.subr.bf16.mxu0 %v1886
    %2482 = vmatpush2.bf16.msra.mxu0 %v1885
    %2483 = vmatprep.subr.bf16.mxu0 %v1882
    %2484 = vmatpush2.bf16.msra.mxu0 %v1881
    %2485 = vmatprep.subr.bf16.mxu0 %v1878
    %2486 = vmatpush2.bf16.msra.mxu0 %v1877
    %2487 = vmatprep.subr.bf16.mxu0 %v1874
    %2488 = vmatpush2.bf16.msra.mxu0 %v1873
    %2489 = vmatprep.subr.bf16.mxu0 %v1870
    %2490 = vmatpush2.bf16.msra.mxu0 %v1869
    %2491 = vmatprep.subr.bf16.mxu0 %v1866
    %2492 = vmatpush2.bf16.msra.mxu0 %v1865
    %2493 = vmatprep.mubr.bf16.mxu0 %v654
    %2494 = vmatmul.mubr.bf16.gmra.mxu0 %v653
    %v2495 = vpop.f32.mrf.mxu0
    %v2496 = vadd.f32 %v2455, %v2495
    %v2497 = vpop.f32.mrf.mxu0
    %v2498 = vadd.f32 %v2457, %v2497
    %v2499 = vpop.f32.mrf.mxu0
    %v2500 = vpop.f32.mrf.mxu0
    %2501 = vdwg.mxu0
    %2502 = vmatprep.subr.bf16.mxu0 %v1926
    %2503 = vmatpush1.bf16.msra.mxu0 %v1925
    %2504 = vmatprep.subr.bf16.mxu0 %v1922
    %2505 = vmatpush1.bf16.msra.mxu0 %v1921
    %2506 = vmatprep.subr.bf16.mxu0 %v1918
    %2507 = vmatpush1.bf16.msra.mxu0 %v1917
    %2508 = vmatprep.subr.bf16.mxu0 %v1914
    %2509 = vmatpush1.bf16.msra.mxu0 %v1913
    %2510 = vmatprep.subr.bf16.mxu0 %v1910
    %2511 = vmatpush1.bf16.msra.mxu0 %v1909
    %2512 = vmatprep.subr.bf16.mxu0 %v1906
    %2513 = vmatpush1.bf16.msra.mxu0 %v1905
    %2514 = vmatprep.subr.bf16.mxu0 %v1902
    %2515 = vmatpush1.bf16.msra.mxu0 %v1901
    %2516 = vmatprep.subr.bf16.mxu0 %v1898
    %2517 = vmatpush1.bf16.msra.mxu0 %v1897
    %2518 = vmatprep.subr.bf16.mxu0 %v1958
    %2519 = vmatpush2.bf16.msra.mxu0 %v1957
    %2520 = vmatprep.subr.bf16.mxu0 %v1954
    %2521 = vmatpush2.bf16.msra.mxu0 %v1953
    %2522 = vmatprep.subr.bf16.mxu0 %v1950
    %2523 = vmatpush2.bf16.msra.mxu0 %v1949
    %2524 = vmatprep.subr.bf16.mxu0 %v1946
    %2525 = vmatpush2.bf16.msra.mxu0 %v1945
    %2526 = vmatprep.subr.bf16.mxu0 %v1942
    %2527 = vmatpush2.bf16.msra.mxu0 %v1941
    %2528 = vmatprep.subr.bf16.mxu0 %v1938
    %2529 = vmatpush2.bf16.msra.mxu0 %v1937
    %2530 = vmatprep.subr.bf16.mxu0 %v1934
    %2531 = vmatpush2.bf16.msra.mxu0 %v1933
    %2532 = vmatprep.subr.bf16.mxu0 %v1930
    %2533 = vmatpush2.bf16.msra.mxu0 %v1929
    %2534 = vmatprep.mubr.bf16.mxu0 %v656
    %2535 = vmatmul.mubr.bf16.gmra.mxu0 %v655
    %v2536 = vpop.f32.mrf.mxu0
    %v2537 = vadd.f32 %v2496, %v2536
    %v2538 = vpop.f32.mrf.mxu0
    %v2539 = vadd.f32 %v2498, %v2538
    %v2540 = vpop.f32.mrf.mxu0
    %v2541 = vpop.f32.mrf.mxu0
    %2542 = vdwg.mxu0
    %vm2543 = vcmp.ge.f32.partialorder %v2373, 0.0
    %vm2544 = vcmp.ge.f32.partialorder %v2375, 0.0
    %vm2545 = vcmp.ge.f32.partialorder %v2537, 0.0
    %vm2546 = vcmp.ge.f32.partialorder %v2539, 0.0
    %v2547 = vmul.f32 %v2373, 0.2
    %v2548 = vmul.f32 %v2375, 0.2
    %v2549 = vmul.f32 %v2537, 0.2
    %v2550 = vmul.f32 %v2539, 0.2
    %v2551 = vsel %vm2543, %v2373, %v2547
    %v2552 = vsel %vm2544, %v2375, %v2548
    %v2553 = vsel %vm2545, %v2537, %v2549
    %v2554 = vsel %vm2546, %v2539, %v2550
    %v2555 = vpack.c.bf16 %v2551, %v2551
    %v2556 = vpack.c.bf16 %v2552, %v2552
    %v2557 = vpack.c.bf16 %v2553, %v2553
    %v2558 = vpack.c.bf16 %v2554, %v2554
    %v2559 = vld [vmem:[%s5] sm:$0xff]
    %v2560 = vld [vmem:[%s5 + $0x8] sm:$0xff]
    %v2561 = vld [vmem:[%s5 + $0x10] sm:$0xff]
    %v2562 = vld [vmem:[%s5 + $0x18] sm:$0xff]
    %v2563 = vld [vmem:[%s5 + $0x20] sm:$0xff]
    %v2564 = vld [vmem:[%s5 + $0x28] sm:$0xff]
    %v2565 = vld [vmem:[%s5 + $0x30] sm:$0xff]
    %v2566 = vld [vmem:[%s5 + $0x38] sm:$0xff]
    %v2567 = vld [vmem:[%s5 + $0x40] sm:$0xff]
    %v2568 = vld [vmem:[%s5 + $0x48] sm:$0xff]
    %v2569 = vld [vmem:[%s5 + $0x50] sm:$0xff]
    %v2570 = vld [vmem:[%s5 + $0x58] sm:$0xff]
    %v2571 = vld [vmem:[%s5 + $0x60] sm:$0xff]
    %v2572 = vld [vmem:[%s5 + $0x68] sm:$0xff]
    %v2573 = vld [vmem:[%s5 + $0x70] sm:$0xff]
    %v2574 = vld [vmem:[%s5 + $0x78] sm:$0xff]
    %v2575 = vld [vmem:[%s5 + $0x80] sm:$0xff]
    %v2576 = vld [vmem:[%s5 + $0x88] sm:$0xff]
    %v2577 = vld [vmem:[%s5 + $0x90] sm:$0xff]
    %v2578 = vld [vmem:[%s5 + $0x98] sm:$0xff]
    %v2579 = vld [vmem:[%s5 + $0xa0] sm:$0xff]
    %v2580 = vld [vmem:[%s5 + $0xa8] sm:$0xff]
    %v2581 = vld [vmem:[%s5 + $0xb0] sm:$0xff]
    %v2582 = vld [vmem:[%s5 + $0xb8] sm:$0xff]
    %v2583 = vld [vmem:[%s5 + $0xc0] sm:$0xff]
    %v2584 = vld [vmem:[%s5 + $0xc8] sm:$0xff]
    %v2585 = vld [vmem:[%s5 + $0xd0] sm:$0xff]
    %v2586 = vld [vmem:[%s5 + $0xd8] sm:$0xff]
    %v2587 = vld [vmem:[%s5 + $0xe0] sm:$0xff]
    %v2588 = vld [vmem:[%s5 + $0xe8] sm:$0xff]
    %v2589 = vld [vmem:[%s5 + $0xf0] sm:$0xff]
    %v2590 = vld [vmem:[%s5 + $0xf8] sm:$0xff]
    %v2591 = vld [vmem:[%s5 + $0x100] sm:$0xff]
    %v2592 = vld [vmem:[%s5 + $0x108] sm:$0xff]
    %v2593 = vld [vmem:[%s5 + $0x110] sm:$0xff]
    %v2594 = vld [vmem:[%s5 + $0x118] sm:$0xff]
    %v2595 = vld [vmem:[%s5 + $0x120] sm:$0xff]
    %v2596 = vld [vmem:[%s5 + $0x128] sm:$0xff]
    %v2597 = vld [vmem:[%s5 + $0x130] sm:$0xff]
    %v2598 = vld [vmem:[%s5 + $0x138] sm:$0xff]
    %v2599 = vld [vmem:[%s5 + $0x140] sm:$0xff]
    %v2600 = vld [vmem:[%s5 + $0x148] sm:$0xff]
    %v2601 = vld [vmem:[%s5 + $0x150] sm:$0xff]
    %v2602 = vld [vmem:[%s5 + $0x158] sm:$0xff]
    %v2603 = vld [vmem:[%s5 + $0x160] sm:$0xff]
    %v2604 = vld [vmem:[%s5 + $0x168] sm:$0xff]
    %v2605 = vld [vmem:[%s5 + $0x170] sm:$0xff]
    %v2606 = vld [vmem:[%s5 + $0x178] sm:$0xff]
    %v2607 = vld [vmem:[%s5 + $0x180] sm:$0xff]
    %v2608 = vld [vmem:[%s5 + $0x188] sm:$0xff]
    %v2609 = vld [vmem:[%s5 + $0x190] sm:$0xff]
    %v2610 = vld [vmem:[%s5 + $0x198] sm:$0xff]
    %v2611 = vld [vmem:[%s5 + $0x1a0] sm:$0xff]
    %v2612 = vld [vmem:[%s5 + $0x1a8] sm:$0xff]
    %v2613 = vld [vmem:[%s5 + $0x1b0] sm:$0xff]
    %v2614 = vld [vmem:[%s5 + $0x1b8] sm:$0xff]
    %v2615 = vld [vmem:[%s5 + $0x1c0] sm:$0xff]
    %v2616 = vld [vmem:[%s5 + $0x1c8] sm:$0xff]
    %v2617 = vld [vmem:[%s5 + $0x1d0] sm:$0xff]
    %v2618 = vld [vmem:[%s5 + $0x1d8] sm:$0xff]
    %v2619 = vld [vmem:[%s5 + $0x1e0] sm:$0xff]
    %v2620 = vld [vmem:[%s5 + $0x1e8] sm:$0xff]
    %v2621 = vld [vmem:[%s5 + $0x1f0] sm:$0xff]
    %v2622 = vld [vmem:[%s5 + $0x1f8] sm:$0xff]
    %v2623 = vld [vmem:[%s6] sm:$0x3]
    %v2625 = vlaneseq
    %v2626 = vshrl.u32 %v2625, 7
    %v2627 = vsub.s32 0, %v2626
    %v2628 = vrot.slane %v2623, %v2627
    %v2629 = vlaneseq
    %v2630 = vshrl.u32 %v2629, 7
    %v2631 = vsub.s32 1, %v2630
    %v2632 = vrot.slane %v2623, %v2631
    %v2699 = vunpack.c.l.b16 %v2559
    %v2700 = vunpack.c.h.b16 %v2559
    %v2701 = vunpack.c.l.b16 %v2560
    %v2702 = vunpack.c.h.b16 %v2560
    %v2703 = vunpack.c.l.b16 %v2561
    %v2704 = vunpack.c.h.b16 %v2561
    %v2705 = vunpack.c.l.b16 %v2562
    %v2706 = vunpack.c.h.b16 %v2562
    %v2707 = vunpack.c.l.b16 %v2563
    %v2708 = vunpack.c.h.b16 %v2563
    %v2709 = vunpack.c.l.b16 %v2564
    %v2710 = vunpack.c.h.b16 %v2564
    %v2711 = vunpack.c.l.b16 %v2565
    %v2712 = vunpack.c.h.b16 %v2565
    %v2713 = vunpack.c.l.b16 %v2566
    %v2714 = vunpack.c.h.b16 %v2566
    %v2715 = vunpack.c.l.b16 %v2567
    %v2716 = vunpack.c.h.b16 %v2567
    %v2717 = vunpack.c.l.b16 %v2568
    %v2718 = vunpack.c.h.b16 %v2568
    %v2719 = vunpack.c.l.b16 %v2569
    %v2720 = vunpack.c.h.b16 %v2569
    %v2721 = vunpack.c.l.b16 %v2570
    %v2722 = vunpack.c.h.b16 %v2570
    %v2723 = vunpack.c.l.b16 %v2571
    %v2724 = vunpack.c.h.b16 %v2571
    %v2725 = vunpack.c.l.b16 %v2572
    %v2726 = vunpack.c.h.b16 %v2572
    %v2727 = vunpack.c.l.b16 %v2573
    %v2728 = vunpack.c.h.b16 %v2573
    %v2729 = vunpack.c.l.b16 %v2574
    %v2730 = vunpack.c.h.b16 %v2574
    %v2731 = vunpack.c.l.b16 %v2575
    %v2732 = vunpack.c.h.b16 %v2575
    %v2733 = vunpack.c.l.b16 %v2576
    %v2734 = vunpack.c.h.b16 %v2576
    %v2735 = vunpack.c.l.b16 %v2577
    %v2736 = vunpack.c.h.b16 %v2577
    %v2737 = vunpack.c.l.b16 %v2578
    %v2738 = vunpack.c.h.b16 %v2578
    %v2739 = vunpack.c.l.b16 %v2579
    %v2740 = vunpack.c.h.b16 %v2579
    %v2741 = vunpack.c.l.b16 %v2580
    %v2742 = vunpack.c.h.b16 %v2580
    %v2743 = vunpack.c.l.b16 %v2581
    %v2744 = vunpack.c.h.b16 %v2581
    %v2745 = vunpack.c.l.b16 %v2582
    %v2746 = vunpack.c.h.b16 %v2582
    %v2747 = vunpack.c.l.b16 %v2583
    %v2748 = vunpack.c.h.b16 %v2583
    %v2749 = vunpack.c.l.b16 %v2584
    %v2750 = vunpack.c.h.b16 %v2584
    %v2751 = vunpack.c.l.b16 %v2585
    %v2752 = vunpack.c.h.b16 %v2585
    %v2753 = vunpack.c.l.b16 %v2586
    %v2754 = vunpack.c.h.b16 %v2586
    %v2755 = vunpack.c.l.b16 %v2587
    %v2756 = vunpack.c.h.b16 %v2587
    %v2757 = vunpack.c.l.b16 %v2588
    %v2758 = vunpack.c.h.b16 %v2588
    %v2759 = vunpack.c.l.b16 %v2589
    %v2760 = vunpack.c.h.b16 %v2589
    %v2761 = vunpack.c.l.b16 %v2590
    %v2762 = vunpack.c.h.b16 %v2590
    %v2763 = vunpack.c.l.b16 %v2591
    %v2764 = vunpack.c.h.b16 %v2591
    %v2765 = vunpack.c.l.b16 %v2592
    %v2766 = vunpack.c.h.b16 %v2592
    %v2767 = vunpack.c.l.b16 %v2593
    %v2768 = vunpack.c.h.b16 %v2593
    %v2769 = vunpack.c.l.b16 %v2594
    %v2770 = vunpack.c.h.b16 %v2594
    %v2771 = vunpack.c.l.b16 %v2595
    %v2772 = vunpack.c.h.b16 %v2595
    %v2773 = vunpack.c.l.b16 %v2596
    %v2774 = vunpack.c.h.b16 %v2596
    %v2775 = vunpack.c.l.b16 %v2597
    %v2776 = vunpack.c.h.b16 %v2597
    %v2777 = vunpack.c.l.b16 %v2598
    %v2778 = vunpack.c.h.b16 %v2598
    %v2779 = vunpack.c.l.b16 %v2599
    %v2780 = vunpack.c.h.b16 %v2599
    %v2781 = vunpack.c.l.b16 %v2600
    %v2782 = vunpack.c.h.b16 %v2600
    %v2783 = vunpack.c.l.b16 %v2601
    %v2784 = vunpack.c.h.b16 %v2601
    %v2785 = vunpack.c.l.b16 %v2602
    %v2786 = vunpack.c.h.b16 %v2602
    %v2787 = vunpack.c.l.b16 %v2603
    %v2788 = vunpack.c.h.b16 %v2603
    %v2789 = vunpack.c.l.b16 %v2604
    %v2790 = vunpack.c.h.b16 %v2604
    %v2791 = vunpack.c.l.b16 %v2605
    %v2792 = vunpack.c.h.b16 %v2605
    %v2793 = vunpack.c.l.b16 %v2606
    %v2794 = vunpack.c.h.b16 %v2606
    %v2795 = vunpack.c.l.b16 %v2607
    %v2796 = vunpack.c.h.b16 %v2607
    %v2797 = vunpack.c.l.b16 %v2608
    %v2798 = vunpack.c.h.b16 %v2608
    %v2799 = vunpack.c.l.b16 %v2609
    %v2800 = vunpack.c.h.b16 %v2609
    %v2801 = vunpack.c.l.b16 %v2610
    %v2802 = vunpack.c.h.b16 %v2610
    %v2803 = vunpack.c.l.b16 %v2611
    %v2804 = vunpack.c.h.b16 %v2611
    %v2805 = vunpack.c.l.b16 %v2612
    %v2806 = vunpack.c.h.b16 %v2612
    %v2807 = vunpack.c.l.b16 %v2613
    %v2808 = vunpack.c.h.b16 %v2613
    %v2809 = vunpack.c.l.b16 %v2614
    %v2810 = vunpack.c.h.b16 %v2614
    %v2811 = vunpack.c.l.b16 %v2615
    %v2812 = vunpack.c.h.b16 %v2615
    %v2813 = vunpack.c.l.b16 %v2616
    %v2814 = vunpack.c.h.b16 %v2616
    %v2815 = vunpack.c.l.b16 %v2617
    %v2816 = vunpack.c.h.b16 %v2617
    %v2817 = vunpack.c.l.b16 %v2618
    %v2818 = vunpack.c.h.b16 %v2618
    %v2819 = vunpack.c.l.b16 %v2619
    %v2820 = vunpack.c.h.b16 %v2619
    %v2821 = vunpack.c.l.b16 %v2620
    %v2822 = vunpack.c.h.b16 %v2620
    %v2823 = vunpack.c.l.b16 %v2621
    %v2824 = vunpack.c.h.b16 %v2621
    %v2825 = vunpack.c.l.b16 %v2622
    %v2826 = vunpack.c.h.b16 %v2622
    %v2827 = vpack.c.b16 %v2701, %v2699
    %v2828 = vpack.c.b16 %v2702, %v2700
    %v2829 = vpack.c.b16 %v2705, %v2703
    %v2830 = vpack.c.b16 %v2706, %v2704
    %v2831 = vpack.c.b16 %v2709, %v2707
    %v2832 = vpack.c.b16 %v2710, %v2708
    %v2833 = vpack.c.b16 %v2713, %v2711
    %v2834 = vpack.c.b16 %v2714, %v2712
    %v2835 = vpack.c.b16 %v2717, %v2715
    %v2836 = vpack.c.b16 %v2718, %v2716
    %v2837 = vpack.c.b16 %v2721, %v2719
    %v2838 = vpack.c.b16 %v2722, %v2720
    %v2839 = vpack.c.b16 %v2725, %v2723
    %v2840 = vpack.c.b16 %v2726, %v2724
    %v2841 = vpack.c.b16 %v2729, %v2727
    %v2842 = vpack.c.b16 %v2730, %v2728
    %v2843 = vpack.c.b16 %v2733, %v2731
    %v2844 = vpack.c.b16 %v2734, %v2732
    %v2845 = vpack.c.b16 %v2737, %v2735
    %v2846 = vpack.c.b16 %v2738, %v2736
    %v2847 = vpack.c.b16 %v2741, %v2739
    %v2848 = vpack.c.b16 %v2742, %v2740
    %v2849 = vpack.c.b16 %v2745, %v2743
    %v2850 = vpack.c.b16 %v2746, %v2744
    %v2851 = vpack.c.b16 %v2749, %v2747
    %v2852 = vpack.c.b16 %v2750, %v2748
    %v2853 = vpack.c.b16 %v2753, %v2751
    %v2854 = vpack.c.b16 %v2754, %v2752
    %v2855 = vpack.c.b16 %v2757, %v2755
    %v2856 = vpack.c.b16 %v2758, %v2756
    %v2857 = vpack.c.b16 %v2761, %v2759
    %v2858 = vpack.c.b16 %v2762, %v2760
    %v2859 = vpack.c.b16 %v2765, %v2763
    %v2860 = vpack.c.b16 %v2766, %v2764
    %v2861 = vpack.c.b16 %v2769, %v2767
    %v2862 = vpack.c.b16 %v2770, %v2768
    %v2863 = vpack.c.b16 %v2773, %v2771
    %v2864 = vpack.c.b16 %v2774, %v2772
    %v2865 = vpack.c.b16 %v2777, %v2775
    %v2866 = vpack.c.b16 %v2778, %v2776
    %v2867 = vpack.c.b16 %v2781, %v2779
    %v2868 = vpack.c.b16 %v2782, %v2780
    %v2869 = vpack.c.b16 %v2785, %v2783
    %v2870 = vpack.c.b16 %v2786, %v2784
    %v2871 = vpack.c.b16 %v2789, %v2787
    %v2872 = vpack.c.b16 %v2790, %v2788
    %v2873 = vpack.c.b16 %v2793, %v2791
    %v2874 = vpack.c.b16 %v2794, %v2792
    %v2875 = vpack.c.b16 %v2797, %v2795
    %v2876 = vpack.c.b16 %v2798, %v2796
    %v2877 = vpack.c.b16 %v2801, %v2799
    %v2878 = vpack.c.b16 %v2802, %v2800
    %v2879 = vpack.c.b16 %v2805, %v2803
    %v2880 = vpack.c.b16 %v2806, %v2804
    %v2881 = vpack.c.b16 %v2809, %v2807
    %v2882 = vpack.c.b16 %v2810, %v2808
    %v2883 = vpack.c.b16 %v2813, %v2811
    %v2884 = vpack.c.b16 %v2814, %v2812
    %v2885 = vpack.c.b16 %v2817, %v2815
    %v2886 = vpack.c.b16 %v2818, %v2816
    %v2887 = vpack.c.b16 %v2821, %v2819
    %v2888 = vpack.c.b16 %v2822, %v2820
    %v2889 = vpack.c.b16 %v2825, %v2823
    %v2890 = vpack.c.b16 %v2826, %v2824
    %2955 = vmatprep.subr.bf16.mxu0 %v2842
    %2956 = vmatpush1.bf16.msra.mxu0 %v2841
    %2957 = vmatprep.subr.bf16.mxu0 %v2840
    %2958 = vmatpush1.bf16.msra.mxu0 %v2839
    %2959 = vmatprep.subr.bf16.mxu0 %v2838
    %2960 = vmatpush1.bf16.msra.mxu0 %v2837
    %2961 = vmatprep.subr.bf16.mxu0 %v2836
    %2962 = vmatpush1.bf16.msra.mxu0 %v2835
    %2963 = vmatprep.subr.bf16.mxu0 %v2834
    %2964 = vmatpush1.bf16.msra.mxu0 %v2833
    %2965 = vmatprep.subr.bf16.mxu0 %v2832
    %2966 = vmatpush1.bf16.msra.mxu0 %v2831
    %2967 = vmatprep.subr.bf16.mxu0 %v2830
    %2968 = vmatpush1.bf16.msra.mxu0 %v2829
    %2969 = vmatprep.subr.bf16.mxu0 %v2828
    %2970 = vmatpush1.bf16.msra.mxu0 %v2827
    %2971 = vmatprep.subr.bf16.mxu0 %v2858
    %2972 = vmatpush2.bf16.msra.mxu0 %v2857
    %2973 = vmatprep.subr.bf16.mxu0 %v2856
    %2974 = vmatpush2.bf16.msra.mxu0 %v2855
    %2975 = vmatprep.subr.bf16.mxu0 %v2854
    %2976 = vmatpush2.bf16.msra.mxu0 %v2853
    %2977 = vmatprep.subr.bf16.mxu0 %v2852
    %2978 = vmatpush2.bf16.msra.mxu0 %v2851
    %2979 = vmatprep.subr.bf16.mxu0 %v2850
    %2980 = vmatpush2.bf16.msra.mxu0 %v2849
    %2981 = vmatprep.subr.bf16.mxu0 %v2848
    %2982 = vmatpush2.bf16.msra.mxu0 %v2847
    %2983 = vmatprep.subr.bf16.mxu0 %v2846
    %2984 = vmatpush2.bf16.msra.mxu0 %v2845
    %2985 = vmatprep.subr.bf16.mxu0 %v2844
    %2986 = vmatpush2.bf16.msra.mxu0 %v2843
    %2987 = vmatprep.mubr.bf16.mxu0 %v2556
    %2988 = vmatmul.mubr.bf16.gmra.mxu0 %v2555
    %v2989 = vpop.f32.mrf.mxu0
    %v2990 = vadd.f32 %v2628, %v2989
    %v2991 = vpop.f32.mrf.mxu0
    %v2992 = vadd.f32 %v2632, %v2991
    %v2993 = vpop.f32.mrf.mxu0
    %v2994 = vpop.f32.mrf.mxu0
    %2995 = vdwg.mxu0
    %2996 = vmatprep.subr.bf16.mxu0 %v2874
    %2997 = vmatpush1.bf16.msra.mxu0 %v2873
    %2998 = vmatprep.subr.bf16.mxu0 %v2872
    %2999 = vmatpush1.bf16.msra.mxu0 %v2871
    %3000 = vmatprep.subr.bf16.mxu0 %v2870
    %3001 = vmatpush1.bf16.msra.mxu0 %v2869
    %3002 = vmatprep.subr.bf16.mxu0 %v2868
    %3003 = vmatpush1.bf16.msra.mxu0 %v2867
    %3004 = vmatprep.subr.bf16.mxu0 %v2866
    %3005 = vmatpush1.bf16.msra.mxu0 %v2865
    %3006 = vmatprep.subr.bf16.mxu0 %v2864
    %3007 = vmatpush1.bf16.msra.mxu0 %v2863
    %3008 = vmatprep.subr.bf16.mxu0 %v2862
    %3009 = vmatpush1.bf16.msra.mxu0 %v2861
    %3010 = vmatprep.subr.bf16.mxu0 %v2860
    %3011 = vmatpush1.bf16.msra.mxu0 %v2859
    %3012 = vmatprep.subr.bf16.mxu0 %v2890
    %3013 = vmatpush2.bf16.msra.mxu0 %v2889
    %3014 = vmatprep.subr.bf16.mxu0 %v2888
    %3015 = vmatpush2.bf16.msra.mxu0 %v2887
    %3016 = vmatprep.subr.bf16.mxu0 %v2886
    %3017 = vmatpush2.bf16.msra.mxu0 %v2885
    %3018 = vmatprep.subr.bf16.mxu0 %v2884
    %3019 = vmatpush2.bf16.msra.mxu0 %v2883
    %3020 = vmatprep.subr.bf16.mxu0 %v2882
    %3021 = vmatpush2.bf16.msra.mxu0 %v2881
    %3022 = vmatprep.subr.bf16.mxu0 %v2880
    %3023 = vmatpush2.bf16.msra.mxu0 %v2879
    %3024 = vmatprep.subr.bf16.mxu0 %v2878
    %3025 = vmatpush2.bf16.msra.mxu0 %v2877
    %3026 = vmatprep.subr.bf16.mxu0 %v2876
    %3027 = vmatpush2.bf16.msra.mxu0 %v2875
    %3028 = vmatprep.mubr.bf16.mxu0 %v2558
    %3029 = vmatmul.mubr.bf16.gmra.mxu0 %v2557
    %v3030 = vpop.f32.mrf.mxu0
    %v3031 = vadd.f32 %v2990, %v3030
    %v3032 = vpop.f32.mrf.mxu0
    %v3033 = vadd.f32 %v2992, %v3032
    %v3034 = vpop.f32.mrf.mxu0
    %v3035 = vpop.f32.mrf.mxu0
    %3036 = vdwg.mxu0
    %vm3037 = vcmp.ge.f32.partialorder %v3031, 0.0
    %vm3038 = vcmp.ge.f32.partialorder %v3033, 0.0
    %v3039 = vmul.f32 %v3031, 0.2
    %v3040 = vmul.f32 %v3033, 0.2
    %v3041 = vsel %vm3037, %v3031, %v3039
    %v3042 = vsel %vm3038, %v3033, %v3040
    %v3043 = vpack.c.bf16 %v3041, %v3041
    %v3044 = vpack.c.bf16 %v3042, %v3042
    %v3045 = vld [vmem:[%s7] sm:$0xf]
    %v3046 = vld [vmem:[%s7 + $0x4] sm:$0xf]
    %v3047 = vld [vmem:[%s7 + $0x8] sm:$0xf]
    %v3048 = vld [vmem:[%s7 + $0xc] sm:$0xf]
    %v3049 = vld [vmem:[%s7 + $0x10] sm:$0xf]
    %v3050 = vld [vmem:[%s7 + $0x14] sm:$0xf]
    %v3051 = vld [vmem:[%s7 + $0x18] sm:$0xf]
    %v3052 = vld [vmem:[%s7 + $0x1c] sm:$0xf]
    %v3053 = vld [vmem:[%s7 + $0x20] sm:$0xf]
    %v3054 = vld [vmem:[%s7 + $0x24] sm:$0xf]
    %v3055 = vld [vmem:[%s7 + $0x28] sm:$0xf]
    %v3056 = vld [vmem:[%s7 + $0x2c] sm:$0xf]
    %v3057 = vld [vmem:[%s7 + $0x30] sm:$0xf]
    %v3058 = vld [vmem:[%s7 + $0x34] sm:$0xf]
    %v3059 = vld [vmem:[%s7 + $0x38] sm:$0xf]
    %v3060 = vld [vmem:[%s7 + $0x3c] sm:$0xf]
    %v3061 = vld [vmem:[%s7 + $0x40] sm:$0xf]
    %v3062 = vld [vmem:[%s7 + $0x44] sm:$0xf]
    %v3063 = vld [vmem:[%s7 + $0x48] sm:$0xf]
    %v3064 = vld [vmem:[%s7 + $0x4c] sm:$0xf]
    %v3065 = vld [vmem:[%s7 + $0x50] sm:$0xf]
    %v3066 = vld [vmem:[%s7 + $0x54] sm:$0xf]
    %v3067 = vld [vmem:[%s7 + $0x58] sm:$0xf]
    %v3068 = vld [vmem:[%s7 + $0x5c] sm:$0xf]
    %v3069 = vld [vmem:[%s7 + $0x60] sm:$0xf]
    %v3070 = vld [vmem:[%s7 + $0x64] sm:$0xf]
    %v3071 = vld [vmem:[%s7 + $0x68] sm:$0xf]
    %v3072 = vld [vmem:[%s7 + $0x6c] sm:$0xf]
    %v3073 = vld [vmem:[%s7 + $0x70] sm:$0xf]
    %v3074 = vld [vmem:[%s7 + $0x74] sm:$0xf]
    %v3075 = vld [vmem:[%s7 + $0x78] sm:$0xf]
    %v3076 = vld [vmem:[%s7 + $0x7c] sm:$0xf]
    %v3077 = vld [vmem:[%s8] sm:$0x1]
    %v3079 = vlaneseq
    %v3080 = vshrl.u32 %v3079, 7
    %v3081 = vsub.s32 0, %v3080
    %v3082 = vrot.slane %v3077, %v3081
    %v3116 = vunpack.c.l.b16 %v3045
    %v3117 = vunpack.c.l.b16 %v3046
    %v3118 = vunpack.c.l.b16 %v3047
    %v3119 = vunpack.c.l.b16 %v3048
    %v3120 = vunpack.c.l.b16 %v3049
    %v3121 = vunpack.c.l.b16 %v3050
    %v3122 = vunpack.c.l.b16 %v3051
    %v3123 = vunpack.c.l.b16 %v3052
    %v3124 = vunpack.c.l.b16 %v3053
    %v3125 = vunpack.c.l.b16 %v3054
    %v3126 = vunpack.c.l.b16 %v3055
    %v3127 = vunpack.c.l.b16 %v3056
    %v3128 = vunpack.c.l.b16 %v3057
    %v3129 = vunpack.c.l.b16 %v3058
    %v3130 = vunpack.c.l.b16 %v3059
    %v3131 = vunpack.c.l.b16 %v3060
    %v3132 = vunpack.c.l.b16 %v3061
    %v3133 = vunpack.c.l.b16 %v3062
    %v3134 = vunpack.c.l.b16 %v3063
    %v3135 = vunpack.c.l.b16 %v3064
    %v3136 = vunpack.c.l.b16 %v3065
    %v3137 = vunpack.c.l.b16 %v3066
    %v3138 = vunpack.c.l.b16 %v3067
    %v3139 = vunpack.c.l.b16 %v3068
    %v3140 = vunpack.c.l.b16 %v3069
    %v3141 = vunpack.c.l.b16 %v3070
    %v3142 = vunpack.c.l.b16 %v3071
    %v3143 = vunpack.c.l.b16 %v3072
    %v3144 = vunpack.c.l.b16 %v3073
    %v3145 = vunpack.c.l.b16 %v3074
    %v3146 = vunpack.c.l.b16 %v3075
    %v3147 = vunpack.c.l.b16 %v3076
    %v3148 = vpack.c.b16 %v3117, %v3116
    %v3149 = vpack.c.b16 %v3119, %v3118
    %v3150 = vpack.c.b16 %v3121, %v3120
    %v3151 = vpack.c.b16 %v3123, %v3122
    %v3152 = vpack.c.b16 %v3125, %v3124
    %v3153 = vpack.c.b16 %v3127, %v3126
    %v3154 = vpack.c.b16 %v3129, %v3128
    %v3155 = vpack.c.b16 %v3131, %v3130
    %v3156 = vpack.c.b16 %v3133, %v3132
    %v3157 = vpack.c.b16 %v3135, %v3134
    %v3158 = vpack.c.b16 %v3137, %v3136
    %v3159 = vpack.c.b16 %v3139, %v3138
    %v3160 = vpack.c.b16 %v3141, %v3140
    %v3161 = vpack.c.b16 %v3143, %v3142
    %v3162 = vpack.c.b16 %v3145, %v3144
    %v3163 = vpack.c.b16 %v3147, %v3146
    %3180 = vmatprep.subr.bf16.mxu0 0
    %3181 = vmatpush1.bf16.msra.mxu0 %v3155
    %3182 = vmatprep.subr.bf16.mxu0 0
    %3183 = vmatpush1.bf16.msra.mxu0 %v3154
    %3184 = vmatprep.subr.bf16.mxu0 0
    %3185 = vmatpush1.bf16.msra.mxu0 %v3153
    %3186 = vmatprep.subr.bf16.mxu0 0
    %3187 = vmatpush1.bf16.msra.mxu0 %v3152
    %3188 = vmatprep.subr.bf16.mxu0 0
    %3189 = vmatpush1.bf16.msra.mxu0 %v3151
    %3190 = vmatprep.subr.bf16.mxu0 0
    %3191 = vmatpush1.bf16.msra.mxu0 %v3150
    %3192 = vmatprep.subr.bf16.mxu0 0
    %3193 = vmatpush1.bf16.msra.mxu0 %v3149
    %3194 = vmatprep.subr.bf16.mxu0 0
    %3195 = vmatpush1.bf16.msra.mxu0 %v3148
    %3196 = vmatprep.subr.bf16.mxu0 0
    %3197 = vmatpush2.bf16.msra.mxu0 %v3163
    %3198 = vmatprep.subr.bf16.mxu0 0
    %3199 = vmatpush2.bf16.msra.mxu0 %v3162
    %3200 = vmatprep.subr.bf16.mxu0 0
    %3201 = vmatpush2.bf16.msra.mxu0 %v3161
    %3202 = vmatprep.subr.bf16.mxu0 0
    %3203 = vmatpush2.bf16.msra.mxu0 %v3160
    %3204 = vmatprep.subr.bf16.mxu0 0
    %3205 = vmatpush2.bf16.msra.mxu0 %v3159
    %3206 = vmatprep.subr.bf16.mxu0 0
    %3207 = vmatpush2.bf16.msra.mxu0 %v3158
    %3208 = vmatprep.subr.bf16.mxu0 0
    %3209 = vmatpush2.bf16.msra.mxu0 %v3157
    %3210 = vmatprep.subr.bf16.mxu0 0
    %3211 = vmatpush2.bf16.msra.mxu0 %v3156
    %3212 = vmatprep.mubr.bf16.mxu0 %v3044
    %3213 = vmatmul.mubr.bf16.gmra.mxu0 %v3043
    %v3214 = vpop.f32.mrf.mxu0
    %v3215 = vadd.f32 %v3082, %v3214
    %v3216 = vpop.f32.mrf.mxu0
    %v3217 = vpop.f32.mrf.mxu0
    %v3218 = vpop.f32.mrf.mxu0
    %3219 = vdwg.mxu0
    %3220 = vst [vmem:[#allocation2] sm:$0xff] %v3215
    // Predicated region
    $region38: #{stock_dnn_forward.1} parent=1 // pred_check
      _
    $region39: #{stock_dnn_forward.1} parent=1 // pred_check_branch
      %3222 = sbr.rel (0) target = $region41
    $region40: #{stock_dnn_forward.1} parent=1 // pred_region
      %s3224 = ssub.s32 128, 128
      %3225 = vsyncadd [#allocation3], %s3224
      %s3227 = sshll.u32 [#allocation2], 4
      %s3228 = int_to_ptr.vmem [resolvable:$true] %s3227
      %3230 = dma.vmem_to_hbm [thread:$0]  %s3228, 128, %s9, [#allocation3]
    $region41: #{stock_dnn_forward.1} parent=1 // pred_fallthru
      _
    // Predicated region
    $region42: #{stock_dnn_forward.1} parent=1 // pred_check
      _
    $region43: #{stock_dnn_forward.1} parent=1 // pred_check_branch
      %3232 = sbr.rel (0) target = $region45
    $region44: #{stock_dnn_forward.1} parent=1 // pred_region
      %3233 = dma.done [#allocation3], 128
    $region45: #{stock_dnn_forward.1} parent=1 // pred_fallthru
      _
    %3234 = vsyncpa [#allocation3], 1

</llo_original>
